<compile_context>
chip_gen: v7x
topology: tpu7x:2x2x1
jax: 0.10.0
libtpu: 0.0.40
codegen_flags: <defaults>
</compile_context>

<pallas_src>
import functools
import math

import numpy as np
import jax
import jax.numpy as jnp
from jax.experimental import pallas as pl
from jax.experimental.pallas import tpu as pltpu

LN_EPS = 1e-5
_GELU_C = math.sqrt(2.0 / math.pi)


def _layernorm(x, w, b):
    mean = jnp.mean(x, axis=-1, keepdims=True)
    var = jnp.mean(jnp.square(x - mean), axis=-1, keepdims=True)
    return (x - mean) * jax.lax.rsqrt(var + LN_EPS) * w + b


def _gelu_tanh(x):
    # TODO(synk): PyTorch F.gelu default is the exact erf GELU; erf lowering in
    # Mosaic is not guaranteed, so the tanh approximation is used (~2e-3 max err).
    return 0.5 * x * (1.0 + jnp.tanh(_GELU_C * (x + 0.044715 * x * x * x)))


def _transformer_layer_kernel(x_ref, ln1w_ref, ln1b_ref,
                              wqkv_ref, bqkv_ref, wo_ref, bo_ref,
                              ln2w_ref, ln2b_ref,
                              w1_ref, b1_ref, w2_ref, b2_ref,
                              o_ref,
                              *, num_heads, head_dim, seq_len, batch):
    H, d, L, N = num_heads, head_dim, seq_len, batch
    Hd = H * d
    bf16 = jnp.bfloat16
    f32 = jnp.float32

    x2 = x_ref[...]                                            # (N*L, E) f32

    # ---------------- attention branch -------------------------------------
    xn = _layernorm(x2, ln1w_ref[...], ln1b_ref[...])          # (N*L, E) f32

    # Single fused QKV projection: one lane-dense 2D matmul, f32 accumulation.
    # (softmax scale already folded into the Q weight/bias block by the wrapper)
    qkv = jnp.dot(xn.astype(bf16), wqkv_ref[...],
                  preferred_element_type=f32) + bqkv_ref[...]  # (N*L, 3*Hd)

    q = qkv[:, 0 * Hd:1 * Hd]
    k = qkv[:, 1 * Hd:2 * Hd]
    v = qkv[:, 2 * Hd:3 * Hd]

    def to_heads(z):
        # (N*L, H*d) -> (N*H, L, d); token t = n*L + l, column i = h*d + j.
        return z.reshape(N, L, H, d).transpose(0, 2, 1, 3).reshape(N * H, L, d)

    qh = to_heads(q).astype(bf16)
    kh = to_heads(k).astype(bf16)
    vh = to_heads(v).astype(bf16)

    s = jnp.einsum('bld,bmd->blm', qh, kh,
                   preferred_element_type=f32)                 # (N*H, L, L)
    m = jnp.max(s, axis=-1, keepdims=True)
    e = jnp.exp(s - m)
    p = e * pl.reciprocal(jnp.sum(e, axis=-1, keepdims=True), approx=True)
    # TODO(synk): attention dropout (dropout_p=0.0) is the identity -> skipped.

    ctx = jnp.einsum('blm,bmd->bld', p.astype(bf16), vh,
                     preferred_element_type=f32)               # (N*H, L, d)
    # (N*H, L, d) -> (N*L, H*d) so the output projection is one 2D matmul.
    ctx2 = ctx.reshape(N, H, L, d).transpose(0, 2, 1, 3).reshape(N * L, Hd)

    attn = jnp.dot(ctx2.astype(bf16), wo_ref[...],
                   preferred_element_type=f32) + bo_ref[...]   # (N*L, E)
    x1 = attn + x2                                  # residual add (dropout p=0)

    # ---------------- MLP branch --------------------------------------------
    xn2 = _layernorm(x1, ln2w_ref[...], ln2b_ref[...])
    h1 = jnp.dot(xn2.astype(bf16), w1_ref[...],
                 preferred_element_type=f32) + b1_ref[...]     # (N*L, F)
    g = _gelu_tanh(h1)
    # TODO(synk): activation dropout (p=0.0) is the identity -> skipped.
    y = jnp.dot(g.astype(bf16), w2_ref[...],
                preferred_element_type=f32) + b2_ref[...]      # (N*L, E)
    o_ref[...] = y + x1                             # residual add (dropout p=0)


def transformer_layer(x_lne, params, num_heads):
    """x_lne: (L, N, E) float32. Returns (L, N, E) float32."""
    L, N, E = x_lne.shape
    inner = params["qkv_w"].shape[0] // 3
    H = num_heads
    d = inner // H
    scale = float(d) ** -0.5
    bf16 = jnp.bfloat16
    f32 = jnp.float32

    # Lane-dense 2D token slab (token t = n*L + l); inverse applied on output.
    x2 = x_lne.transpose(1, 0, 2).reshape(N * L, E)

    # ---- parameter glue (pure reshapes / de-interleave, done once in XLA) ----
    # qkv_proj output channel r = 3*i + c (i = h*d + j): q rows [0::3], k [1::3],
    # v [2::3].  Fused weight columns grouped [Q | K | V], softmax scale folded
    # into the Q block (weight and bias) once here.
    qkv_w, qkv_b = params["qkv_w"], params["qkv_b"]
    wq = qkv_w[0::3].T * scale                                      # (E, inner)
    wk = qkv_w[1::3].T
    wv = qkv_w[2::3].T
    wqkv = jnp.concatenate([wq, wk, wv], axis=1).astype(bf16)       # (E, 3*inner)
    bqkv = jnp.concatenate([qkv_b[0::3] * scale, qkv_b[1::3],
                            qkv_b[2::3]])[None].astype(f32)         # (1, 3*inner)

    wo = params["out_w"].T.astype(bf16)                             # (inner, E)
    bo = params["out_b"][None].astype(f32)                          # (1, E)
    ln1w, ln1b = params["ln1_w"][None], params["ln1_b"][None]       # (1, E) f32
    ln2w, ln2b = params["ln2_w"][None], params["ln2_b"][None]
    w1 = params["p1"].T.astype(bf16)                                # (E, F)
    b1 = params["p1_b"][None].astype(f32)                           # (1, F)
    w2 = params["p2"].T.astype(bf16)                                # (F, E)
    b2 = params["p2_b"][None].astype(f32)                           # (1, E)

    kernel = functools.partial(_transformer_layer_kernel,
                               num_heads=H, head_dim=d, seq_len=L, batch=N)

    # Single fused invocation: whole arrays resident in VMEM (grid=()), so the
    # intermediate activation never touches HBM and there is one launch.
    out2 = pl.pallas_call(
        kernel,
        out_shape=jax.ShapeDtypeStruct((N * L, E), jnp.float32),
        compiler_params=pltpu.CompilerParams(
            vmem_limit_bytes=32 * 1024 * 1024),
    )(x2, ln1w, ln1b, wqkv, bqkv, wo, bo, ln2w, ln2b, w1, b1, w2, b2)

    return out2.reshape(N, L, E).transpose(1, 0, 2)


def reference_transformer_layer(x, params, num_heads):
    """Pure-JAX (f32) mirror of the PyTorch forward (dropouts are p=0)."""
    L, N, E = x.shape
    inner = params["qkv_w"].shape[0] // 3
    d = inner // num_heads
    scale = float(d) ** -0.5

    def ln(y, w, b):
        m = y.mean(-1, keepdims=True)
        v = ((y - m) ** 2).mean(-1, keepdims=True)
        return (y - m) / jnp.sqrt(v + LN_EPS) * w + b

    residual = x
    h = ln(x, params["ln1_w"], params["ln1_b"])
    qkv = h @ params["qkv_w"].T + params["qkv_b"]                   # (L, N, 3*inner)
    qkv = qkv.reshape(L, N, inner, 3)
    q, k, v = qkv[..., 0], qkv[..., 1], qkv[..., 2]
    q = q.reshape(L, N * num_heads, d).transpose(1, 0, 2)
    k = k.reshape(L, N * num_heads, d).transpose(1, 0, 2)
    v = v.reshape(L, N * num_heads, d).transpose(1, 0, 2)
    attn = scale * jnp.einsum("bld,bmd->blm", q, k)
    attn = jax.nn.softmax(attn, axis=-1)
    o = jnp.einsum("blm,bmd->bld", attn, v)
    o = o.transpose(1, 0, 2).reshape(L, N, inner)
    o = o @ params["out_w"].T + params["out_b"]
    x = o + residual

    residual = x
    h = ln(x, params["ln2_w"], params["ln2_b"])
    h = h @ params["p1"].T + params["p1_b"]
    h = jax.nn.gelu(h, approximate=False)          # exact erf GELU (torch default)
    h = h @ params["p2"].T + params["p2_b"]
    return h + residual


if __name__ == "__main__":
    # Small shapes consistent with the module: seq L=8, batch N=2, embed E=32,
    # heads=4 (head_dim=8, attn_hidden_dim=32), ffn_hidden_dim=64.
    L, N, E = 8, 2, 32
    num_heads = 4
    attn_hidden = 32
    ffn_hidden = 64

    key = jax.random.PRNGKey(0)
    ks = jax.random.split(key, 13)

    def rnd(k, shape, s=0.1):
        return (s * jax.random.normal(k, shape)).astype(jnp.float32)

    params = dict(
        ln1_w=(1.0 + rnd(ks[9], (E,))).astype(jnp.float32),
        ln1_b=rnd(ks[10], (E,)),
        qkv_w=rnd(ks[0], (3 * attn_hidden, E)),
        qkv_b=rnd(ks[1], (3 * attn_hidden,)),
        out_w=rnd(ks[2], (E, attn_hidden)),
        out_b=rnd(ks[3], (E,)),
        ln2_w=(1.0 + rnd(ks[11], (E,))).astype(jnp.float32),
        ln2_b=rnd(ks[12], (E,)),
        p1=rnd(ks[4], (ffn_hidden, E)),
        p1_b=rnd(ks[5], (ffn_hidden,)),
        p2=rnd(ks[6], (E, ffn_hidden)),
        p2_b=rnd(ks[7], (E,)),
    )
    x = jax.random.normal(ks[8], (L, N, E), jnp.float32)

    out = transformer_layer(x, params, num_heads)
    out = jax.block_until_ready(out)
    assert out.shape == (L, N, E)

    ref = reference_transformer_layer(x, params, num_heads)
    np.testing.assert_allclose(np.asarray(out), np.asarray(ref),
                               rtol=2e-2, atol=2e-2)
    print("KERNEL_OK")
</pallas_src>

<mosaic_0001>
module attributes {stable_mosaic.version = 11 : i64} {
  func.func @_transformer_layer_kernel(%arg0: memref<16x32xf32, #tpu.memory_space<vmem>>, %arg1: memref<1x32xf32, #tpu.memory_space<vmem>>, %arg2: memref<1x32xf32, #tpu.memory_space<vmem>>, %arg3: memref<32x96xbf16, #tpu.memory_space<vmem>>, %arg4: memref<1x96xf32, #tpu.memory_space<vmem>>, %arg5: memref<32x32xbf16, #tpu.memory_space<vmem>>, %arg6: memref<1x32xf32, #tpu.memory_space<vmem>>, %arg7: memref<1x32xf32, #tpu.memory_space<vmem>>, %arg8: memref<1x32xf32, #tpu.memory_space<vmem>>, %arg9: memref<32x64xbf16, #tpu.memory_space<vmem>>, %arg10: memref<1x64xf32, #tpu.memory_space<vmem>>, %arg11: memref<64x32xbf16, #tpu.memory_space<vmem>>, %arg12: memref<1x32xf32, #tpu.memory_space<vmem>>, %arg13: memref<16x32xf32, #tpu.memory_space<vmem>>) attributes {dimension_semantics = [], scalar_prefetch = 0 : i64, scratch_operands = 0 : i64, tpu.core_type = #tpu.core_type<tc>} {
    %c0 = arith.constant 0 : index
    %c0_0 = arith.constant 0 : index
    %0 = vector.load %arg0[%c0, %c0_0] : memref<16x32xf32, #tpu.memory_space<vmem>>, vector<16x32xf32>
    %c0_1 = arith.constant 0 : index
    %c0_2 = arith.constant 0 : index
    %1 = vector.load %arg1[%c0_1, %c0_2] : memref<1x32xf32, #tpu.memory_space<vmem>>, vector<1x32xf32>
    %c0_3 = arith.constant 0 : index
    %c0_4 = arith.constant 0 : index
    %2 = vector.load %arg2[%c0_3, %c0_4] : memref<1x32xf32, #tpu.memory_space<vmem>>, vector<1x32xf32>
    %cst = arith.constant dense<0.000000e+00> : vector<16xf32>
    %3 = vector.multi_reduction <add>, %0, %cst [1] : vector<16x32xf32> to vector<16xf32>
    %4 = vector.shape_cast %3 : vector<16xf32> to vector<16x1xf32>
    %cst_5 = arith.constant 3.200000e+01 : f32
    %5 = vector.broadcast %cst_5 : f32 to vector<16x1xf32>
    %6 = arith.divf %4, %5 : vector<16x1xf32>
    %7 = vector.broadcast %6 : vector<16x1xf32> to vector<16x32xf32>
    %8 = arith.subf %0, %7 : vector<16x32xf32>
    %9 = arith.mulf %8, %8 : vector<16x32xf32>
    %cst_6 = arith.constant dense<0.000000e+00> : vector<16xf32>
    %10 = vector.multi_reduction <add>, %9, %cst_6 [1] : vector<16x32xf32> to vector<16xf32>
    %11 = vector.shape_cast %10 : vector<16xf32> to vector<16x1xf32>
    %cst_7 = arith.constant 3.200000e+01 : f32
    %12 = vector.broadcast %cst_7 : f32 to vector<16x1xf32>
    %13 = arith.divf %11, %12 : vector<16x1xf32>
    %14 = vector.broadcast %6 : vector<16x1xf32> to vector<16x32xf32>
    %15 = arith.subf %0, %14 : vector<16x32xf32>
    %cst_8 = arith.constant 9.99999974E-6 : f32
    %16 = vector.broadcast %cst_8 : f32 to vector<16x1xf32>
    %17 = arith.addf %13, %16 : vector<16x1xf32>
    %18 = math.rsqrt %17 : vector<16x1xf32>
    %19 = vector.broadcast %18 : vector<16x1xf32> to vector<16x32xf32>
    %20 = arith.mulf %15, %19 : vector<16x32xf32>
    %21 = vector.broadcast %1 : vector<1x32xf32> to vector<16x32xf32>
    %22 = arith.mulf %20, %21 : vector<16x32xf32>
    %23 = vector.broadcast %2 : vector<1x32xf32> to vector<16x32xf32>
    %24 = arith.addf %22, %23 : vector<16x32xf32>
    %25 = arith.truncf %24 : vector<16x32xf32> to vector<16x32xbf16>
    %c0_9 = arith.constant 0 : index
    %c0_10 = arith.constant 0 : index
    %26 = vector.load %arg3[%c0_9, %c0_10] : memref<32x96xbf16, #tpu.memory_space<vmem>>, vector<32x96xbf16>
    %cst_11 = arith.constant dense<0.000000e+00> : vector<16x96xf32>
    %27 = tpu.matmul %25, %26, %cst_11 {dimension_numbers = #tpu.dot_dimension_numbers<[1], [0], [0], [1], [0, 0, 1, 1], [], []>} : vector<16x32xbf16>, vector<32x96xbf16>, vector<16x96xf32> -> vector<16x96xf32>
    %c0_12 = arith.constant 0 : index
    %c0_13 = arith.constant 0 : index
    %28 = vector.load %arg4[%c0_12, %c0_13] : memref<1x96xf32, #tpu.memory_space<vmem>>, vector<1x96xf32>
    %29 = vector.broadcast %28 : vector<1x96xf32> to vector<16x96xf32>
    %30 = arith.addf %27, %29 : vector<16x96xf32>
    %31 = vector.extract_strided_slice %30 {offsets = [0, 0], sizes = [16, 32], strides = [1, 1]} : vector<16x96xf32> to vector<16x32xf32>
    %32 = vector.extract_strided_slice %30 {offsets = [0, 32], sizes = [16, 32], strides = [1, 1]} : vector<16x96xf32> to vector<16x32xf32>
    %33 = vector.extract_strided_slice %30 {offsets = [0, 64], sizes = [16, 32], strides = [1, 1]} : vector<16x96xf32> to vector<16x32xf32>
    %34 = vector.shape_cast %31 : vector<16x32xf32> to vector<2x8x4x8xf32>
    %35 = tpu.transpose %34, [0, 2, 1, 3] : vector<2x8x4x8xf32> -> vector<2x4x8x8xf32>
    %36 = vector.shape_cast %35 : vector<2x4x8x8xf32> to vector<8x8x8xf32>
    %37 = arith.truncf %36 : vector<8x8x8xf32> to vector<8x8x8xbf16>
    %38 = vector.shape_cast %32 : vector<16x32xf32> to vector<2x8x4x8xf32>
    %39 = tpu.transpose %38, [0, 2, 1, 3] : vector<2x8x4x8xf32> -> vector<2x4x8x8xf32>
    %40 = vector.shape_cast %39 : vector<2x4x8x8xf32> to vector<8x8x8xf32>
    %41 = arith.truncf %40 : vector<8x8x8xf32> to vector<8x8x8xbf16>
    %42 = vector.shape_cast %33 : vector<16x32xf32> to vector<2x8x4x8xf32>
    %43 = tpu.transpose %42, [0, 2, 1, 3] : vector<2x8x4x8xf32> -> vector<2x4x8x8xf32>
    %44 = vector.shape_cast %43 : vector<2x4x8x8xf32> to vector<8x8x8xf32>
    %45 = arith.truncf %44 : vector<8x8x8xf32> to vector<8x8x8xbf16>
    "tpu.trace_start"() <{level = 10 : i32, message = "bld,bmd->blm"}> : () -> ()
    %cst_14 = arith.constant dense<0.000000e+00> : vector<8x8x8xf32>
    %46 = tpu.matmul %37, %41, %cst_14 {dimension_numbers = #tpu.dot_dimension_numbers<[2], [2], [1], [1], [0, 0, 0, 1, 1, 1], [0], [0]>} : vector<8x8x8xbf16>, vector<8x8x8xbf16>, vector<8x8x8xf32> -> vector<8x8x8xf32>
    "tpu.trace_stop"() : () -> ()
    %cst_15 = arith.constant dense<0xFF800000> : vector<8x8xf32>
    %47 = vector.multi_reduction <maximumf>, %46, %cst_15 [2] : vector<8x8x8xf32> to vector<8x8xf32>
    %48 = vector.shape_cast %47 : vector<8x8xf32> to vector<8x8x1xf32>
    %49 = vector.broadcast %48 : vector<8x8x1xf32> to vector<8x8x8xf32>
    %50 = arith.subf %46, %49 : vector<8x8x8xf32>
    %51 = math.exp %50 : vector<8x8x8xf32>
    %cst_16 = arith.constant dense<0.000000e+00> : vector<8x8xf32>
    %52 = vector.multi_reduction <add>, %51, %cst_16 [2] : vector<8x8x8xf32> to vector<8x8xf32>
    %53 = vector.shape_cast %52 : vector<8x8xf32> to vector<8x8x1xf32>
    %54 = tpu.reciprocal %53 {approx = true} : vector<8x8x1xf32> -> vector<8x8x1xf32>
    %55 = vector.broadcast %54 : vector<8x8x1xf32> to vector<8x8x8xf32>
    %56 = arith.mulf %51, %55 : vector<8x8x8xf32>
    %57 = arith.truncf %56 : vector<8x8x8xf32> to vector<8x8x8xbf16>
    "tpu.trace_start"() <{level = 10 : i32, message = "blm,bmd->bld"}> : () -> ()
    %cst_17 = arith.constant dense<0.000000e+00> : vector<8x8x8xf32>
    %58 = tpu.matmul %57, %45, %cst_17 {dimension_numbers = #tpu.dot_dimension_numbers<[2], [1], [1], [2], [0, 0, 0, 1, 1, 2], [0], [0]>} : vector<8x8x8xbf16>, vector<8x8x8xbf16>, vector<8x8x8xf32> -> vector<8x8x8xf32>
    "tpu.trace_stop"() : () -> ()
    %59 = vector.shape_cast %58 : vector<8x8x8xf32> to vector<2x4x8x8xf32>
    %60 = tpu.transpose %59, [0, 2, 1, 3] : vector<2x4x8x8xf32> -> vector<2x8x4x8xf32>
    %61 = vector.shape_cast %60 : vector<2x8x4x8xf32> to vector<16x32xf32>
    %62 = arith.truncf %61 : vector<16x32xf32> to vector<16x32xbf16>
    %c0_18 = arith.constant 0 : index
    %c0_19 = arith.constant 0 : index
    %63 = vector.load %arg5[%c0_18, %c0_19] : memref<32x32xbf16, #tpu.memory_space<vmem>>, vector<32x32xbf16>
    %cst_20 = arith.constant dense<0.000000e+00> : vector<16x32xf32>
    %64 = tpu.matmul %62, %63, %cst_20 {dimension_numbers = #tpu.dot_dimension_numbers<[1], [0], [0], [1], [0, 0, 1, 1], [], []>} : vector<16x32xbf16>, vector<32x32xbf16>, vector<16x32xf32> -> vector<16x32xf32>
    %c0_21 = arith.constant 0 : index
    %c0_22 = arith.constant 0 : index
    %65 = vector.load %arg6[%c0_21, %c0_22] : memref<1x32xf32, #tpu.memory_space<vmem>>, vector<1x32xf32>
    %66 = vector.broadcast %65 : vector<1x32xf32> to vector<16x32xf32>
    %67 = arith.addf %64, %66 : vector<16x32xf32>
    %68 = arith.addf %67, %0 : vector<16x32xf32>
    %c0_23 = arith.constant 0 : index
    %c0_24 = arith.constant 0 : index
    %69 = vector.load %arg7[%c0_23, %c0_24] : memref<1x32xf32, #tpu.memory_space<vmem>>, vector<1x32xf32>
    %c0_25 = arith.constant 0 : index
    %c0_26 = arith.constant 0 : index
    %70 = vector.load %arg8[%c0_25, %c0_26] : memref<1x32xf32, #tpu.memory_space<vmem>>, vector<1x32xf32>
    %cst_27 = arith.constant dense<0.000000e+00> : vector<16xf32>
    %71 = vector.multi_reduction <add>, %68, %cst_27 [1] : vector<16x32xf32> to vector<16xf32>
    %72 = vector.shape_cast %71 : vector<16xf32> to vector<16x1xf32>
    %cst_28 = arith.constant 3.200000e+01 : f32
    %73 = vector.broadcast %cst_28 : f32 to vector<16x1xf32>
    %74 = arith.divf %72, %73 : vector<16x1xf32>
    %75 = vector.broadcast %74 : vector<16x1xf32> to vector<16x32xf32>
    %76 = arith.subf %68, %75 : vector<16x32xf32>
    %77 = arith.mulf %76, %76 : vector<16x32xf32>
    %cst_29 = arith.constant dense<0.000000e+00> : vector<16xf32>
    %78 = vector.multi_reduction <add>, %77, %cst_29 [1] : vector<16x32xf32> to vector<16xf32>
    %79 = vector.shape_cast %78 : vector<16xf32> to vector<16x1xf32>
    %cst_30 = arith.constant 3.200000e+01 : f32
    %80 = vector.broadcast %cst_30 : f32 to vector<16x1xf32>
    %81 = arith.divf %79, %80 : vector<16x1xf32>
    %82 = vector.broadcast %74 : vector<16x1xf32> to vector<16x32xf32>
    %83 = arith.subf %68, %82 : vector<16x32xf32>
    %cst_31 = arith.constant 9.99999974E-6 : f32
    %84 = vector.broadcast %cst_31 : f32 to vector<16x1xf32>
    %85 = arith.addf %81, %84 : vector<16x1xf32>
    %86 = math.rsqrt %85 : vector<16x1xf32>
    %87 = vector.broadcast %86 : vector<16x1xf32> to vector<16x32xf32>
    %88 = arith.mulf %83, %87 : vector<16x32xf32>
    %89 = vector.broadcast %69 : vector<1x32xf32> to vector<16x32xf32>
    %90 = arith.mulf %88, %89 : vector<16x32xf32>
    %91 = vector.broadcast %70 : vector<1x32xf32> to vector<16x32xf32>
    %92 = arith.addf %90, %91 : vector<16x32xf32>
    %93 = arith.truncf %92 : vector<16x32xf32> to vector<16x32xbf16>
    %c0_32 = arith.constant 0 : index
    %c0_33 = arith.constant 0 : index
    %94 = vector.load %arg9[%c0_32, %c0_33] : memref<32x64xbf16, #tpu.memory_space<vmem>>, vector<32x64xbf16>
    %cst_34 = arith.constant dense<0.000000e+00> : vector<16x64xf32>
    %95 = tpu.matmul %93, %94, %cst_34 {dimension_numbers = #tpu.dot_dimension_numbers<[1], [0], [0], [1], [0, 0, 1, 1], [], []>} : vector<16x32xbf16>, vector<32x64xbf16>, vector<16x64xf32> -> vector<16x64xf32>
    %c0_35 = arith.constant 0 : index
    %c0_36 = arith.constant 0 : index
    %96 = vector.load %arg10[%c0_35, %c0_36] : memref<1x64xf32, #tpu.memory_space<vmem>>, vector<1x64xf32>
    %97 = vector.broadcast %96 : vector<1x64xf32> to vector<16x64xf32>
    %98 = arith.addf %95, %97 : vector<16x64xf32>
    %cst_37 = arith.constant 5.000000e-01 : f32
    %99 = vector.broadcast %cst_37 : f32 to vector<16x64xf32>
    %100 = arith.mulf %99, %98 : vector<16x64xf32>
    %cst_38 = arith.constant 4.471500e-02 : f32
    %101 = vector.broadcast %cst_38 : f32 to vector<16x64xf32>
    %102 = arith.mulf %101, %98 : vector<16x64xf32>
    %103 = arith.mulf %102, %98 : vector<16x64xf32>
    %104 = arith.mulf %103, %98 : vector<16x64xf32>
    %105 = arith.addf %98, %104 : vector<16x64xf32>
    %cst_39 = arith.constant 0.797884583 : f32
    %106 = vector.broadcast %cst_39 : f32 to vector<16x64xf32>
    %107 = arith.mulf %106, %105 : vector<16x64xf32>
    %108 = math.tanh %107 : vector<16x64xf32>
    %cst_40 = arith.constant 1.000000e+00 : f32
    %109 = vector.broadcast %cst_40 : f32 to vector<16x64xf32>
    %110 = arith.addf %109, %108 : vector<16x64xf32>
    %111 = arith.mulf %100, %110 : vector<16x64xf32>
    %112 = arith.truncf %111 : vector<16x64xf32> to vector<16x64xbf16>
    %c0_41 = arith.constant 0 : index
    %c0_42 = arith.constant 0 : index
    %113 = vector.load %arg11[%c0_41, %c0_42] : memref<64x32xbf16, #tpu.memory_space<vmem>>, vector<64x32xbf16>
    %cst_43 = arith.constant dense<0.000000e+00> : vector<16x32xf32>
    %114 = tpu.matmul %112, %113, %cst_43 {dimension_numbers = #tpu.dot_dimension_numbers<[1], [0], [0], [1], [0, 0, 1, 1], [], []>} : vector<16x64xbf16>, vector<64x32xbf16>, vector<16x32xf32> -> vector<16x32xf32>
    %c0_44 = arith.constant 0 : index
    %c0_45 = arith.constant 0 : index
    %115 = vector.load %arg12[%c0_44, %c0_45] : memref<1x32xf32, #tpu.memory_space<vmem>>, vector<1x32xf32>
    %116 = vector.broadcast %115 : vector<1x32xf32> to vector<16x32xf32>
    %117 = arith.addf %114, %116 : vector<16x32xf32>
    %118 = arith.addf %117, %68 : vector<16x32xf32>
    %c0_46 = arith.constant 0 : index
    %c0_47 = arith.constant 0 : index
    %119 = vector.load %arg13[%c0_46, %c0_47] : memref<16x32xf32, #tpu.memory_space<vmem>>, vector<16x32xf32>
    tpu.vector_store %arg13[%c0_46, %c0_47], %118 {strides = array<i32>} : memref<16x32xf32, #tpu.memory_space<vmem>>, vector<16x32xf32>,
    return
  }
}

</mosaic_0001>

<llo_original>
// kernel: tpu_custom_call.1
$region0: #{tpu_custom_call.1}
  #allocation0 [shape = 'u32[]', space=smem, size = 0x4, offset = 0x4, fixed_abs, tag = 'smem constant byte address 0x4 - core index']
  #allocation1 [shape = 'u32[144,128]{1,0:T(1,128)}', space=vmem, size = 0x12000, scoped, tag = 'internal scratch']
  %s0 = inlined_call_operand.vmem [shape: f32[16,32], index: 0, kind: input, shape index: {}]
  %s1 = inlined_call_operand.vmem [shape: f32[1,32], index: 1, kind: input, shape index: {}]
  %s2 = inlined_call_operand.vmem [shape: f32[1,32], index: 2, kind: input, shape index: {}]
  %s3 = inlined_call_operand.vmem [shape: bf16[32,96], index: 3, kind: input, shape index: {}]
  %s4 = inlined_call_operand.hbm [shape: f32[1,96], index: 4, kind: input, shape index: {}]
  %s5 = inlined_call_operand.vmem [shape: bf16[32,32], index: 5, kind: input, shape index: {}]
  %s6 = inlined_call_operand.hbm [shape: f32[1,32], index: 6, kind: input, shape index: {}]
  %s7 = inlined_call_operand.hbm [shape: f32[1,32], index: 7, kind: input, shape index: {}]
  %s8 = inlined_call_operand.hbm [shape: f32[1,32], index: 8, kind: input, shape index: {}]
  %s9 = inlined_call_operand.vmem [shape: bf16[32,64], index: 9, kind: input, shape index: {}]
  %s10 = inlined_call_operand.vmem [shape: f32[1,64], index: 10, kind: input, shape index: {}]
  %s11 = inlined_call_operand.vmem [shape: bf16[64,32], index: 11, kind: input, shape index: {}]
  %s12 = inlined_call_operand.vmem [shape: f32[1,32], index: 12, kind: input, shape index: {}]
  %s13 = inlined_call_operand.hbm [shape: f32[16,32], index: 13, kind: output, shape index: {}]
  %s14 = sld [smem:[#allocation0]]
  $region78: #{tpu_custom_call.1} parent=0
    _
  %s16 = ssub.s32 1, %s14
  %s17 = scalar_select 0, %s16, %s14
  $region1: #{tpu_custom_call.1} parent=0
    #allocation2 [shape = 'u8[512]{0}', space=vmem, size = 0x400, scoped, tag = 'input window, operand 4, single buffered']
    #allocation3 [shape = 's32[1]{0}', space=sflag, size = 0x4, scoped, tag = 'scoped memory for tpu_custom_call.1']
    #allocation4 [shape = 's32[1]{0}', space=sflag, size = 0x4, scoped, tag = 'scoped memory for tpu_custom_call.1']
    #allocation5 [shape = 'u8[512]{0}', space=vmem, size = 0x400, scoped, tag = 'input window, operand 6, single buffered']
    #allocation6 [shape = 's32[1]{0}', space=sflag, size = 0x4, scoped, tag = 'scoped memory for tpu_custom_call.1']
    #allocation7 [shape = 'u8[512]{0}', space=vmem, size = 0x400, scoped, tag = 'input window, operand 7, single buffered']
    #allocation8 [shape = 'u8[512]{0}', space=vmem, size = 0x400, scoped, tag = 'input window, operand 8, single buffered']
    #allocation9 [shape = 's32[1]{0}', space=sflag, size = 0x4, scoped, tag = 'scoped memory for tpu_custom_call.1']
    #allocation10 [shape = 'u8[8192]{0}', space=vmem, size = 0x2000, scoped, tag = 'output window, operand 0, single buffered']
    %18 = vsyncpa [#allocation3], 0
    %19 = vsyncpa [#allocation6], 0
    %20 = vsyncpa [#allocation9], 0
    %21 = vsyncpa [#allocation4], 0
    // Predicated region
    $region2: #{tpu_custom_call.1} parent=1 // pred_check
      _
    $region3: #{tpu_custom_call.1} parent=1 // pred_check_branch
      %23 = sbr.rel (0) target = $region5
    $region4: #{tpu_custom_call.1} parent=1 // pred_region
      _
    $region5: #{tpu_custom_call.1} parent=1 // pred_fallthru
      _
    // Predicated region
    $region6: #{tpu_custom_call.1} parent=1 // pred_check
      _
    $region7: #{tpu_custom_call.1} parent=1 // pred_check_branch
      %25 = sbr.rel (0) target = $region9
    $region8: #{tpu_custom_call.1} parent=1 // pred_region
      _
    $region9: #{tpu_custom_call.1} parent=1 // pred_fallthru
      _
    // Predicated region
    $region10: #{tpu_custom_call.1} parent=1 // pred_check
      _
    $region11: #{tpu_custom_call.1} parent=1 // pred_check_branch
      %27 = sbr.rel (0) target = $region13
    $region12: #{tpu_custom_call.1} parent=1 // pred_region
      _
    $region13: #{tpu_custom_call.1} parent=1 // pred_fallthru
      _
    // Predicated region
    $region14: #{tpu_custom_call.1} parent=1 // pred_check
      _
    $region15: #{tpu_custom_call.1} parent=1 // pred_check_branch
      %29 = sbr.rel (0) target = $region17
    $region16: #{tpu_custom_call.1} parent=1 // pred_region
      _
    $region17: #{tpu_custom_call.1} parent=1 // pred_fallthru
      _
    // Predicated region
    $region18: #{tpu_custom_call.1} parent=1 // pred_check
      _
    $region19: #{tpu_custom_call.1} parent=1 // pred_check_branch
      %31 = sbr.rel (0) target = $region21
    $region20: #{tpu_custom_call.1} parent=1 // pred_region
      %s33 = ssub.s32 16, 16
      %34 = vsyncadd [#allocation3], %s33
      %s36 = sshll.u32 [#allocation2], 4
      %s37 = int_to_ptr.vmem [resolvable:$true] %s36
      %39 = dma.hbm_to_vmem [thread:$0]  %s4, 16, %s37, [#allocation3]
    $region21: #{tpu_custom_call.1} parent=1 // pred_fallthru
      _
    // Predicated region
    $region22: #{tpu_custom_call.1} parent=1 // pred_check
      _
    $region23: #{tpu_custom_call.1} parent=1 // pred_check_branch
      %41 = sbr.rel (0) target = $region25
    $region24: #{tpu_custom_call.1} parent=1 // pred_region
      _
    $region25: #{tpu_custom_call.1} parent=1 // pred_fallthru
      _
    // Predicated region
    $region26: #{tpu_custom_call.1} parent=1 // pred_check
      _
    $region27: #{tpu_custom_call.1} parent=1 // pred_check_branch
      %43 = sbr.rel (0) target = $region29
    $region28: #{tpu_custom_call.1} parent=1 // pred_region
      %s45 = ssub.s32 16, 16
      %46 = vsyncadd [#allocation6], %s45
      %s48 = sshll.u32 [#allocation5], 4
      %s49 = int_to_ptr.vmem [resolvable:$true] %s48
      %51 = dma.hbm_to_vmem [thread:$0]  %s6, 16, %s49, [#allocation6]
    $region29: #{tpu_custom_call.1} parent=1 // pred_fallthru
      _
    // Predicated region
    $region30: #{tpu_custom_call.1} parent=1 // pred_check
      _
    $region31: #{tpu_custom_call.1} parent=1 // pred_check_branch
      %53 = sbr.rel (0) target = $region33
    $region32: #{tpu_custom_call.1} parent=1 // pred_region
      %s55 = ssub.s32 16, 16
      %56 = vsyncadd [#allocation6], %s55
      %s58 = sshll.u32 [#allocation7], 4
      %s59 = int_to_ptr.vmem [resolvable:$true] %s58
      %61 = dma.hbm_to_vmem [thread:$0]  %s7, 16, %s59, [#allocation6]
    $region33: #{tpu_custom_call.1} parent=1 // pred_fallthru
      _
    // Predicated region
    $region34: #{tpu_custom_call.1} parent=1 // pred_check
      _
    $region35: #{tpu_custom_call.1} parent=1 // pred_check_branch
      %63 = sbr.rel (0) target = $region37
    $region36: #{tpu_custom_call.1} parent=1 // pred_region
      %s65 = ssub.s32 16, 16
      %66 = vsyncadd [#allocation9], %s65
      %s68 = sshll.u32 [#allocation8], 4
      %s69 = int_to_ptr.vmem [resolvable:$true] %s68
      %71 = dma.hbm_to_vmem [thread:$0]  %s8, 16, %s69, [#allocation9]
    $region37: #{tpu_custom_call.1} parent=1 // pred_fallthru
      _
    // Predicated region
    $region38: #{tpu_custom_call.1} parent=1 // pred_check
      _
    $region39: #{tpu_custom_call.1} parent=1 // pred_check_branch
      %73 = sbr.rel (0) target = $region41
    $region40: #{tpu_custom_call.1} parent=1 // pred_region
      _
    $region41: #{tpu_custom_call.1} parent=1 // pred_fallthru
      _
    // Predicated region
    $region42: #{tpu_custom_call.1} parent=1 // pred_check
      _
    $region43: #{tpu_custom_call.1} parent=1 // pred_check_branch
      %75 = sbr.rel (0) target = $region45
    $region44: #{tpu_custom_call.1} parent=1 // pred_region
      _
    $region45: #{tpu_custom_call.1} parent=1 // pred_fallthru
      _
    // Predicated region
    $region46: #{tpu_custom_call.1} parent=1 // pred_check
      _
    $region47: #{tpu_custom_call.1} parent=1 // pred_check_branch
      %77 = sbr.rel (0) target = $region49
    $region48: #{tpu_custom_call.1} parent=1 // pred_region
      _
    $region49: #{tpu_custom_call.1} parent=1 // pred_fallthru
      _
    // Predicated region
    $region50: #{tpu_custom_call.1} parent=1 // pred_check
      _
    $region51: #{tpu_custom_call.1} parent=1 // pred_check_branch
      %79 = sbr.rel (0) target = $region53
    $region52: #{tpu_custom_call.1} parent=1 // pred_region
      _
    $region53: #{tpu_custom_call.1} parent=1 // pred_fallthru
      _
    // Predicated region
    $region54: #{tpu_custom_call.1} parent=1 // pred_check
      _
    $region55: #{tpu_custom_call.1} parent=1 // pred_check_branch
      %81 = sbr.rel (0) target = $region57
    $region56: #{tpu_custom_call.1} parent=1 // pred_region
      %82 = dma.done [#allocation3], 16
    $region57: #{tpu_custom_call.1} parent=1 // pred_fallthru
      _
    // Predicated region
    $region58: #{tpu_custom_call.1} parent=1 // pred_check
      _
    $region59: #{tpu_custom_call.1} parent=1 // pred_check_branch
      %84 = sbr.rel (0) target = $region61
    $region60: #{tpu_custom_call.1} parent=1 // pred_region
      %85 = dma.done [#allocation6], 16
    $region61: #{tpu_custom_call.1} parent=1 // pred_fallthru
      _
    // Predicated region
    $region62: #{tpu_custom_call.1} parent=1 // pred_check
      _
    $region63: #{tpu_custom_call.1} parent=1 // pred_check_branch
      %87 = sbr.rel (0) target = $region65
    $region64: #{tpu_custom_call.1} parent=1 // pred_region
      %88 = dma.done [#allocation6], 16
    $region65: #{tpu_custom_call.1} parent=1 // pred_fallthru
      _
    // Predicated region
    $region66: #{tpu_custom_call.1} parent=1 // pred_check
      _
    $region67: #{tpu_custom_call.1} parent=1 // pred_check_branch
      %90 = sbr.rel (0) target = $region69
    $region68: #{tpu_custom_call.1} parent=1 // pred_region
      %91 = dma.done [#allocation9], 16
    $region69: #{tpu_custom_call.1} parent=1 // pred_fallthru
      _
    %v93 = vld [vmem:[%s0] sm:$0xff]
    %v94 = vld [vmem:[%s0 + $0x8] sm:$0xff]
    %v95 = vld [vmem:[%s1] sm:$0x1]
    %v96 = vld [vmem:[%s2] sm:$0x1]
    %vm97 = vcmask 261120
    %v98 = vsel %vm97, %v93, 0.0
    %99 = vadd.xlane.f32.xlu0 %v98
    %v100 = vpop.xlane.xlu0 %99
    %v101 = vsel %vm97, %v94, 0.0
    %102 = vadd.xlane.f32.xlu0 %v101
    %v103 = vpop.xlane.xlu0 %102
    %v104 = vrcp.pop 32.0
    %v105 = vmul.f32 %v100, %v104
    %v106 = vmul.f32 %v103, %v104
    %v107 = vsub.f32 %v93, %v105
    %v108 = vsub.f32 %v94, %v106
    %v109 = vmul.f32 %v107, %v107
    %v110 = vmul.f32 %v108, %v108
    %v111 = vsel %vm97, %v109, 0.0
    %112 = vadd.xlane.f32.xlu0 %v111
    %v113 = vpop.xlane.xlu0 %112
    %v114 = vsel %vm97, %v110, 0.0
    %115 = vadd.xlane.f32.xlu0 %v114
    %v116 = vpop.xlane.xlu0 %115
    %v117 = vmul.f32 %v113, %v104
    %v118 = vmul.f32 %v116, %v104
    %v119 = vadd.f32 %v117, 1e-05
    %v120 = vadd.f32 %v118, 1e-05
    %v121 = vrsqrt.pop %v119
    %v122 = vrsqrt.pop %v120
    %v123 = vmul.f32 %v107, %v121
    %v124 = vmul.f32 %v108, %v122
    %v126 = vlaneseq
    %v127 = vshrl.u32 %v126, 7
    %v128 = vsub.s32 0, %v127
    %v129 = vrot.slane %v95, %v128
    %v131 = vmul.f32 %v123, %v129
    %v132 = vmul.f32 %v124, %v129
    %v134 = vlaneseq
    %v135 = vshrl.u32 %v134, 7
    %v136 = vsub.s32 0, %v135
    %v137 = vrot.slane %v96, %v136
    %v139 = vadd.f32 %v131, %v137
    %v140 = vadd.f32 %v132, %v137
    %v141 = vpack.c.bf16 %v140, %v139
    %v142 = vld [vmem:[%s3] sm:$0xf]
    %v143 = vld [vmem:[%s3 + $0x4] sm:$0xf]
    %v144 = vld [vmem:[%s3 + $0x8] sm:$0xf]
    %v145 = vld [vmem:[%s3 + $0xc] sm:$0xf]
    %v146 = vld [vmem:[#allocation2] sm:$0x1]
    %v148 = vlaneseq
    %v149 = vshrl.u32 %v148, 7
    %v150 = vsub.s32 0, %v149
    %v151 = vrot.slane %v146, %v150
    %v157 = vunpack.c.l.b16 %v142
    %v158 = vunpack.c.l.b16 %v143
    %v159 = vunpack.c.l.b16 %v144
    %v160 = vunpack.c.l.b16 %v145
    %v161 = vpack.c.b16 %v158, %v157
    %v162 = vpack.c.b16 %v160, %v159
    %v166 = vsel %vm97, %v141, 0
    %168 = vmatprep.subr.bf16.mxu0 0
    %169 = vmatpush1.bf16.msra.mxu0 %v161
    %170 = vmatprep.subr.bf16.mxu0 0
    %171 = vmatpush1.bf16.msra.mxu0 %v162
    %172 = vmatprep.subr.bf16.mxu0 0
    %173 = vmatpush1.bf16.msra.mxu0 0
    %174 = vmatprep.subr.bf16.mxu0 0
    %175 = vmatpush1.bf16.msra.mxu0 0
    %176 = vmatprep.subr.bf16.mxu0 0
    %177 = vmatpush1.bf16.msra.mxu0 0
    %178 = vmatprep.subr.bf16.mxu0 0
    %179 = vmatpush1.bf16.msra.mxu0 0
    %180 = vmatprep.subr.bf16.mxu0 0
    %181 = vmatpush1.bf16.msra.mxu0 0
    %182 = vmatprep.subr.bf16.mxu0 0
    %183 = vmatpush1.bf16.msra.mxu0 0
    %184 = vmatprep.subr.bf16.mxu0 0
    %185 = vmatpush1.bf16.msra.mxu0 0
    %186 = vmatprep.subr.bf16.mxu0 0
    %187 = vmatpush1.bf16.msra.mxu0 0
    %188 = vmatprep.subr.bf16.mxu0 0
    %189 = vmatpush1.bf16.msra.mxu0 0
    %190 = vmatprep.subr.bf16.mxu0 0
    %191 = vmatpush1.bf16.msra.mxu0 0
    %192 = vmatprep.subr.bf16.mxu0 0
    %193 = vmatpush1.bf16.msra.mxu0 0
    %194 = vmatprep.subr.bf16.mxu0 0
    %195 = vmatpush1.bf16.msra.mxu0 0
    %196 = vmatprep.subr.bf16.mxu0 0
    %197 = vmatpush1.bf16.msra.mxu0 0
    %198 = vmatprep.subr.bf16.mxu0 0
    %199 = vmatpush1.bf16.msra.mxu0 0
    %200 = vmatprep.mubr.bf16.mxu0 0
    %201 = vmatmul.mubr.bf16.gmra.mrb[0].mxu0 %v166
    %v202 = vpop.f32.mrb[0].mxu0
    %v203 = vadd.f32 %v151, %v202
    %v204 = vpop.f32.mrb[0].mxu0
    %v205 = vpop.f32.mrb[0].mxu0
    %v206 = vadd.f32 %v151, %v205
    %v207 = vpop.f32.mrb[0].mxu0
    %208 = vdwg.mxu0
    %211 = vrot.lane.b32.xlu0 %v203, 120
    %v212 = vpop.permute.xlu0 %211
    %213 = vrot.lane.b32.xlu0 %v206, 120
    %v214 = vpop.permute.xlu0 %213
    %217 = vrot.lane.b32.xlu0 %v203, 112
    %v218 = vpop.permute.xlu0 %217
    %219 = vrot.lane.b32.xlu0 %v206, 112
    %v220 = vpop.permute.xlu0 %219
    %223 = vrot.lane.b32.xlu0 %v203, 104
    %v224 = vpop.permute.xlu0 %223
    %225 = vrot.lane.b32.xlu0 %v206, 104
    %v226 = vpop.permute.xlu0 %225
    %v229 = vcombine.low %v203, %v218
    %v230 = vcombine.high %v203, %v218
    %v232 = vunpack.c.l.s4 1983009808
    %v233 = vunpack.c.0.s8 %v232
    %v234 = vlaneseq
    %v235 = vshrl.u32 %v234, 7
    %v236 = vsub.s32 %v233, %v235
    %v237 = vrot.slane %v229, %v236
    %v239 = vunpack.c.l.s4 1983009808
    %v240 = vunpack.c.0.s8 %v239
    %v241 = vlaneseq
    %v242 = vshrl.u32 %v241, 7
    %v243 = vsub.s32 %v240, %v242
    %v244 = vrot.slane %v230, %v243
    %v245 = vcombine.low %v212, %v224
    %v246 = vcombine.high %v212, %v224
    %v248 = vunpack.c.l.s4 1983009808
    %v249 = vunpack.c.0.s8 %v248
    %v250 = vlaneseq
    %v251 = vshrl.u32 %v250, 7
    %v252 = vsub.s32 %v249, %v251
    %v253 = vrot.slane %v245, %v252
    %v255 = vunpack.c.l.s4 1983009808
    %v256 = vunpack.c.0.s8 %v255
    %v257 = vlaneseq
    %v258 = vshrl.u32 %v257, 7
    %v259 = vsub.s32 %v256, %v258
    %v260 = vrot.slane %v246, %v259
    %v261 = vcombine.low %v237, %v253
    %v262 = vcombine.high %v237, %v253
    %v264 = vunpack.c.l.s4 1934713408
    %v265 = vunpack.c.0.s8 %v264
    %v266 = vlaneseq
    %v267 = vshrl.u32 %v266, 7
    %v268 = vsub.s32 %v265, %v267
    %v269 = vrot.slane %v261, %v268
    %v271 = vunpack.c.l.s4 1934713408
    %v272 = vunpack.c.0.s8 %v271
    %v273 = vlaneseq
    %v274 = vshrl.u32 %v273, 7
    %v275 = vsub.s32 %v272, %v274
    %v276 = vrot.slane %v262, %v275
    %v277 = vcombine.low %v244, %v260
    %v278 = vcombine.high %v244, %v260
    %v280 = vunpack.c.l.s4 1934713408
    %v281 = vunpack.c.0.s8 %v280
    %v282 = vlaneseq
    %v283 = vshrl.u32 %v282, 7
    %v284 = vsub.s32 %v281, %v283
    %v285 = vrot.slane %v277, %v284
    %v287 = vunpack.c.l.s4 1934713408
    %v288 = vunpack.c.0.s8 %v287
    %v289 = vlaneseq
    %v290 = vshrl.u32 %v289, 7
    %v291 = vsub.s32 %v288, %v290
    %v292 = vrot.slane %v278, %v291
    %v293 = vcombine.high %v269, 0.0
    %v294 = vcombine.high %v276, 0.0
    %v295 = vcombine.high %v285, 0.0
    %v296 = vcombine.high %v292, 0.0
    %v297 = vcombine.low %v206, %v220
    %v298 = vcombine.high %v206, %v220
    %v300 = vunpack.c.l.s4 1983009808
    %v301 = vunpack.c.0.s8 %v300
    %v302 = vlaneseq
    %v303 = vshrl.u32 %v302, 7
    %v304 = vsub.s32 %v301, %v303
    %v305 = vrot.slane %v297, %v304
    %v307 = vunpack.c.l.s4 1983009808
    %v308 = vunpack.c.0.s8 %v307
    %v309 = vlaneseq
    %v310 = vshrl.u32 %v309, 7
    %v311 = vsub.s32 %v308, %v310
    %v312 = vrot.slane %v298, %v311
    %v313 = vcombine.low %v214, %v226
    %v314 = vcombine.high %v214, %v226
    %v316 = vunpack.c.l.s4 1983009808
    %v317 = vunpack.c.0.s8 %v316
    %v318 = vlaneseq
    %v319 = vshrl.u32 %v318, 7
    %v320 = vsub.s32 %v317, %v319
    %v321 = vrot.slane %v313, %v320
    %v323 = vunpack.c.l.s4 1983009808
    %v324 = vunpack.c.0.s8 %v323
    %v325 = vlaneseq
    %v326 = vshrl.u32 %v325, 7
    %v327 = vsub.s32 %v324, %v326
    %v328 = vrot.slane %v314, %v327
    %v329 = vcombine.low %v305, %v321
    %v330 = vcombine.high %v305, %v321
    %v332 = vunpack.c.l.s4 1934713408
    %v333 = vunpack.c.0.s8 %v332
    %v334 = vlaneseq
    %v335 = vshrl.u32 %v334, 7
    %v336 = vsub.s32 %v333, %v335
    %v337 = vrot.slane %v329, %v336
    %v339 = vunpack.c.l.s4 1934713408
    %v340 = vunpack.c.0.s8 %v339
    %v341 = vlaneseq
    %v342 = vshrl.u32 %v341, 7
    %v343 = vsub.s32 %v340, %v342
    %v344 = vrot.slane %v330, %v343
    %v345 = vcombine.low %v312, %v328
    %v346 = vcombine.high %v312, %v328
    %v348 = vunpack.c.l.s4 1934713408
    %v349 = vunpack.c.0.s8 %v348
    %v350 = vlaneseq
    %v351 = vshrl.u32 %v350, 7
    %v352 = vsub.s32 %v349, %v351
    %v353 = vrot.slane %v345, %v352
    %v355 = vunpack.c.l.s4 1934713408
    %v356 = vunpack.c.0.s8 %v355
    %v357 = vlaneseq
    %v358 = vshrl.u32 %v357, 7
    %v359 = vsub.s32 %v356, %v358
    %v360 = vrot.slane %v346, %v359
    %v361 = vcombine.high %v337, 0.0
    %v362 = vcombine.high %v344, 0.0
    %v363 = vcombine.high %v353, 0.0
    %v364 = vcombine.high %v360, 0.0
    %v365 = vcombine.low %v269, %v276
    %v367 = vunpack.c.l.s4 1983009808
    %v368 = vunpack.c.0.s8 %v367
    %v369 = vlaneseq
    %v370 = vshrl.u32 %v369, 7
    %v371 = vsub.s32 %v368, %v370
    %v372 = vrot.slane %v365, %v371
    %v373 = vcombine.low %v293, %v294
    %v375 = vunpack.c.l.s4 1983009808
    %v376 = vunpack.c.0.s8 %v375
    %v377 = vlaneseq
    %v378 = vshrl.u32 %v377, 7
    %v379 = vsub.s32 %v376, %v378
    %v380 = vrot.slane %v373, %v379
    %v381 = vcombine.low %v285, %v292
    %v383 = vunpack.c.l.s4 1983009808
    %v384 = vunpack.c.0.s8 %v383
    %v385 = vlaneseq
    %v386 = vshrl.u32 %v385, 7
    %v387 = vsub.s32 %v384, %v386
    %v388 = vrot.slane %v381, %v387
    %v389 = vcombine.low %v295, %v296
    %v391 = vunpack.c.l.s4 1983009808
    %v392 = vunpack.c.0.s8 %v391
    %v393 = vlaneseq
    %v394 = vshrl.u32 %v393, 7
    %v395 = vsub.s32 %v392, %v394
    %v396 = vrot.slane %v389, %v395
    %v397 = vcombine.low %v372, %v380
    %v398 = vcombine.high %v372, %v380
    %v400 = vunpack.c.l.s4 1934713408
    %v401 = vunpack.c.0.s8 %v400
    %v402 = vlaneseq
    %v403 = vshrl.u32 %v402, 7
    %v404 = vsub.s32 %v401, %v403
    %v405 = vrot.slane %v397, %v404
    %v407 = vunpack.c.l.s4 1934713408
    %v408 = vunpack.c.0.s8 %v407
    %v409 = vlaneseq
    %v410 = vshrl.u32 %v409, 7
    %v411 = vsub.s32 %v408, %v410
    %v412 = vrot.slane %v398, %v411
    %v413 = vcombine.low %v388, %v396
    %v414 = vcombine.high %v388, %v396
    %v416 = vunpack.c.l.s4 1934713408
    %v417 = vunpack.c.0.s8 %v416
    %v418 = vlaneseq
    %v419 = vshrl.u32 %v418, 7
    %v420 = vsub.s32 %v417, %v419
    %v421 = vrot.slane %v413, %v420
    %v423 = vunpack.c.l.s4 1934713408
    %v424 = vunpack.c.0.s8 %v423
    %v425 = vlaneseq
    %v426 = vshrl.u32 %v425, 7
    %v427 = vsub.s32 %v424, %v426
    %v428 = vrot.slane %v414, %v427
    %v429 = vcombine.low %v405, %v421
    %v430 = vcombine.high %v405, %v421
    %v431 = vcombine.low %v412, %v428
    %v432 = vcombine.high %v412, %v428
    %v433 = vcombine.low %v337, %v344
    %v435 = vunpack.c.l.s4 1983009808
    %v436 = vunpack.c.0.s8 %v435
    %v437 = vlaneseq
    %v438 = vshrl.u32 %v437, 7
    %v439 = vsub.s32 %v436, %v438
    %v440 = vrot.slane %v433, %v439
    %v441 = vcombine.low %v361, %v362
    %v443 = vunpack.c.l.s4 1983009808
    %v444 = vunpack.c.0.s8 %v443
    %v445 = vlaneseq
    %v446 = vshrl.u32 %v445, 7
    %v447 = vsub.s32 %v444, %v446
    %v448 = vrot.slane %v441, %v447
    %v449 = vcombine.low %v353, %v360
    %v451 = vunpack.c.l.s4 1983009808
    %v452 = vunpack.c.0.s8 %v451
    %v453 = vlaneseq
    %v454 = vshrl.u32 %v453, 7
    %v455 = vsub.s32 %v452, %v454
    %v456 = vrot.slane %v449, %v455
    %v457 = vcombine.low %v363, %v364
    %v459 = vunpack.c.l.s4 1983009808
    %v460 = vunpack.c.0.s8 %v459
    %v461 = vlaneseq
    %v462 = vshrl.u32 %v461, 7
    %v463 = vsub.s32 %v460, %v462
    %v464 = vrot.slane %v457, %v463
    %v465 = vcombine.low %v440, %v448
    %v466 = vcombine.high %v440, %v448
    %v468 = vunpack.c.l.s4 1934713408
    %v469 = vunpack.c.0.s8 %v468
    %v470 = vlaneseq
    %v471 = vshrl.u32 %v470, 7
    %v472 = vsub.s32 %v469, %v471
    %v473 = vrot.slane %v465, %v472
    %v475 = vunpack.c.l.s4 1934713408
    %v476 = vunpack.c.0.s8 %v475
    %v477 = vlaneseq
    %v478 = vshrl.u32 %v477, 7
    %v479 = vsub.s32 %v476, %v478
    %v480 = vrot.slane %v466, %v479
    %v481 = vcombine.low %v456, %v464
    %v482 = vcombine.high %v456, %v464
    %v484 = vunpack.c.l.s4 1934713408
    %v485 = vunpack.c.0.s8 %v484
    %v486 = vlaneseq
    %v487 = vshrl.u32 %v486, 7
    %v488 = vsub.s32 %v485, %v487
    %v489 = vrot.slane %v481, %v488
    %v491 = vunpack.c.l.s4 1934713408
    %v492 = vunpack.c.0.s8 %v491
    %v493 = vlaneseq
    %v494 = vshrl.u32 %v493, 7
    %v495 = vsub.s32 %v492, %v494
    %v496 = vrot.slane %v482, %v495
    %v497 = vcombine.low %v473, %v489
    %v498 = vcombine.high %v473, %v489
    %v499 = vcombine.low %v480, %v496
    %v500 = vcombine.high %v480, %v496
    %v501 = vpack.c.bf16 %v429, %v429
    %v502 = vpack.c.bf16 %v430, %v430
    %v503 = vpack.c.bf16 %v431, %v431
    %v504 = vpack.c.bf16 %v432, %v432
    %v505 = vpack.c.bf16 %v497, %v497
    %v506 = vpack.c.bf16 %v498, %v498
    %v507 = vpack.c.bf16 %v499, %v499
    %v508 = vpack.c.bf16 %v500, %v500
    %509 = vrot.lane.b32.xlu0 %v203, 96
    %v510 = vpop.permute.xlu0 %509
    %511 = vrot.lane.b32.xlu0 %v206, 96
    %v512 = vpop.permute.xlu0 %511
    %513 = vrot.lane.b32.xlu0 %v212, 96
    %v514 = vpop.permute.xlu0 %513
    %515 = vrot.lane.b32.xlu0 %v214, 96
    %v516 = vpop.permute.xlu0 %515
    %517 = vrot.lane.b32.xlu0 %v218, 96
    %v518 = vpop.permute.xlu0 %517
    %519 = vrot.lane.b32.xlu0 %v220, 96
    %v520 = vpop.permute.xlu0 %519
    %521 = vrot.lane.b32.xlu0 %v224, 96
    %v522 = vpop.permute.xlu0 %521
    %523 = vrot.lane.b32.xlu0 %v226, 96
    %v524 = vpop.permute.xlu0 %523
    %v533 = vcombine.low %v510, %v518
    %v534 = vcombine.high %v510, %v518
    %v536 = vunpack.c.l.s4 1983009808
    %v537 = vunpack.c.0.s8 %v536
    %v538 = vlaneseq
    %v539 = vshrl.u32 %v538, 7
    %v540 = vsub.s32 %v537, %v539
    %v541 = vrot.slane %v533, %v540
    %v543 = vunpack.c.l.s4 1983009808
    %v544 = vunpack.c.0.s8 %v543
    %v545 = vlaneseq
    %v546 = vshrl.u32 %v545, 7
    %v547 = vsub.s32 %v544, %v546
    %v548 = vrot.slane %v534, %v547
    %v549 = vcombine.low %v514, %v522
    %v550 = vcombine.high %v514, %v522
    %v552 = vunpack.c.l.s4 1983009808
    %v553 = vunpack.c.0.s8 %v552
    %v554 = vlaneseq
    %v555 = vshrl.u32 %v554, 7
    %v556 = vsub.s32 %v553, %v555
    %v557 = vrot.slane %v549, %v556
    %v559 = vunpack.c.l.s4 1983009808
    %v560 = vunpack.c.0.s8 %v559
    %v561 = vlaneseq
    %v562 = vshrl.u32 %v561, 7
    %v563 = vsub.s32 %v560, %v562
    %v564 = vrot.slane %v550, %v563
    %v565 = vcombine.low %v541, %v557
    %v566 = vcombine.high %v541, %v557
    %v568 = vunpack.c.l.s4 1934713408
    %v569 = vunpack.c.0.s8 %v568
    %v570 = vlaneseq
    %v571 = vshrl.u32 %v570, 7
    %v572 = vsub.s32 %v569, %v571
    %v573 = vrot.slane %v565, %v572
    %v575 = vunpack.c.l.s4 1934713408
    %v576 = vunpack.c.0.s8 %v575
    %v577 = vlaneseq
    %v578 = vshrl.u32 %v577, 7
    %v579 = vsub.s32 %v576, %v578
    %v580 = vrot.slane %v566, %v579
    %v581 = vcombine.low %v548, %v564
    %v582 = vcombine.high %v548, %v564
    %v584 = vunpack.c.l.s4 1934713408
    %v585 = vunpack.c.0.s8 %v584
    %v586 = vlaneseq
    %v587 = vshrl.u32 %v586, 7
    %v588 = vsub.s32 %v585, %v587
    %v589 = vrot.slane %v581, %v588
    %v591 = vunpack.c.l.s4 1934713408
    %v592 = vunpack.c.0.s8 %v591
    %v593 = vlaneseq
    %v594 = vshrl.u32 %v593, 7
    %v595 = vsub.s32 %v592, %v594
    %v596 = vrot.slane %v582, %v595
    %v597 = vcombine.high %v573, 0.0
    %v598 = vcombine.high %v580, 0.0
    %v599 = vcombine.high %v589, 0.0
    %v600 = vcombine.high %v596, 0.0
    %v601 = vcombine.low %v512, %v520
    %v602 = vcombine.high %v512, %v520
    %v604 = vunpack.c.l.s4 1983009808
    %v605 = vunpack.c.0.s8 %v604
    %v606 = vlaneseq
    %v607 = vshrl.u32 %v606, 7
    %v608 = vsub.s32 %v605, %v607
    %v609 = vrot.slane %v601, %v608
    %v611 = vunpack.c.l.s4 1983009808
    %v612 = vunpack.c.0.s8 %v611
    %v613 = vlaneseq
    %v614 = vshrl.u32 %v613, 7
    %v615 = vsub.s32 %v612, %v614
    %v616 = vrot.slane %v602, %v615
    %v617 = vcombine.low %v516, %v524
    %v618 = vcombine.high %v516, %v524
    %v620 = vunpack.c.l.s4 1983009808
    %v621 = vunpack.c.0.s8 %v620
    %v622 = vlaneseq
    %v623 = vshrl.u32 %v622, 7
    %v624 = vsub.s32 %v621, %v623
    %v625 = vrot.slane %v617, %v624
    %v627 = vunpack.c.l.s4 1983009808
    %v628 = vunpack.c.0.s8 %v627
    %v629 = vlaneseq
    %v630 = vshrl.u32 %v629, 7
    %v631 = vsub.s32 %v628, %v630
    %v632 = vrot.slane %v618, %v631
    %v633 = vcombine.low %v609, %v625
    %v634 = vcombine.high %v609, %v625
    %v636 = vunpack.c.l.s4 1934713408
    %v637 = vunpack.c.0.s8 %v636
    %v638 = vlaneseq
    %v639 = vshrl.u32 %v638, 7
    %v640 = vsub.s32 %v637, %v639
    %v641 = vrot.slane %v633, %v640
    %v643 = vunpack.c.l.s4 1934713408
    %v644 = vunpack.c.0.s8 %v643
    %v645 = vlaneseq
    %v646 = vshrl.u32 %v645, 7
    %v647 = vsub.s32 %v644, %v646
    %v648 = vrot.slane %v634, %v647
    %v649 = vcombine.low %v616, %v632
    %v650 = vcombine.high %v616, %v632
    %v652 = vunpack.c.l.s4 1934713408
    %v653 = vunpack.c.0.s8 %v652
    %v654 = vlaneseq
    %v655 = vshrl.u32 %v654, 7
    %v656 = vsub.s32 %v653, %v655
    %v657 = vrot.slane %v649, %v656
    %v659 = vunpack.c.l.s4 1934713408
    %v660 = vunpack.c.0.s8 %v659
    %v661 = vlaneseq
    %v662 = vshrl.u32 %v661, 7
    %v663 = vsub.s32 %v660, %v662
    %v664 = vrot.slane %v650, %v663
    %v665 = vcombine.high %v641, 0.0
    %v666 = vcombine.high %v648, 0.0
    %v667 = vcombine.high %v657, 0.0
    %v668 = vcombine.high %v664, 0.0
    %v669 = vcombine.low %v573, %v580
    %v671 = vunpack.c.l.s4 1983009808
    %v672 = vunpack.c.0.s8 %v671
    %v673 = vlaneseq
    %v674 = vshrl.u32 %v673, 7
    %v675 = vsub.s32 %v672, %v674
    %v676 = vrot.slane %v669, %v675
    %v677 = vcombine.low %v597, %v598
    %v679 = vunpack.c.l.s4 1983009808
    %v680 = vunpack.c.0.s8 %v679
    %v681 = vlaneseq
    %v682 = vshrl.u32 %v681, 7
    %v683 = vsub.s32 %v680, %v682
    %v684 = vrot.slane %v677, %v683
    %v685 = vcombine.low %v589, %v596
    %v687 = vunpack.c.l.s4 1983009808
    %v688 = vunpack.c.0.s8 %v687
    %v689 = vlaneseq
    %v690 = vshrl.u32 %v689, 7
    %v691 = vsub.s32 %v688, %v690
    %v692 = vrot.slane %v685, %v691
    %v693 = vcombine.low %v599, %v600
    %v695 = vunpack.c.l.s4 1983009808
    %v696 = vunpack.c.0.s8 %v695
    %v697 = vlaneseq
    %v698 = vshrl.u32 %v697, 7
    %v699 = vsub.s32 %v696, %v698
    %v700 = vrot.slane %v693, %v699
    %v701 = vcombine.low %v676, %v684
    %v702 = vcombine.high %v676, %v684
    %v704 = vunpack.c.l.s4 1934713408
    %v705 = vunpack.c.0.s8 %v704
    %v706 = vlaneseq
    %v707 = vshrl.u32 %v706, 7
    %v708 = vsub.s32 %v705, %v707
    %v709 = vrot.slane %v701, %v708
    %v711 = vunpack.c.l.s4 1934713408
    %v712 = vunpack.c.0.s8 %v711
    %v713 = vlaneseq
    %v714 = vshrl.u32 %v713, 7
    %v715 = vsub.s32 %v712, %v714
    %v716 = vrot.slane %v702, %v715
    %v717 = vcombine.low %v692, %v700
    %v718 = vcombine.high %v692, %v700
    %v720 = vunpack.c.l.s4 1934713408
    %v721 = vunpack.c.0.s8 %v720
    %v722 = vlaneseq
    %v723 = vshrl.u32 %v722, 7
    %v724 = vsub.s32 %v721, %v723
    %v725 = vrot.slane %v717, %v724
    %v727 = vunpack.c.l.s4 1934713408
    %v728 = vunpack.c.0.s8 %v727
    %v729 = vlaneseq
    %v730 = vshrl.u32 %v729, 7
    %v731 = vsub.s32 %v728, %v730
    %v732 = vrot.slane %v718, %v731
    %v733 = vcombine.low %v709, %v725
    %v734 = vcombine.high %v709, %v725
    %v735 = vcombine.low %v716, %v732
    %v736 = vcombine.high %v716, %v732
    %v737 = vcombine.low %v641, %v648
    %v739 = vunpack.c.l.s4 1983009808
    %v740 = vunpack.c.0.s8 %v739
    %v741 = vlaneseq
    %v742 = vshrl.u32 %v741, 7
    %v743 = vsub.s32 %v740, %v742
    %v744 = vrot.slane %v737, %v743
    %v745 = vcombine.low %v665, %v666
    %v747 = vunpack.c.l.s4 1983009808
    %v748 = vunpack.c.0.s8 %v747
    %v749 = vlaneseq
    %v750 = vshrl.u32 %v749, 7
    %v751 = vsub.s32 %v748, %v750
    %v752 = vrot.slane %v745, %v751
    %v753 = vcombine.low %v657, %v664
    %v755 = vunpack.c.l.s4 1983009808
    %v756 = vunpack.c.0.s8 %v755
    %v757 = vlaneseq
    %v758 = vshrl.u32 %v757, 7
    %v759 = vsub.s32 %v756, %v758
    %v760 = vrot.slane %v753, %v759
    %v761 = vcombine.low %v667, %v668
    %v763 = vunpack.c.l.s4 1983009808
    %v764 = vunpack.c.0.s8 %v763
    %v765 = vlaneseq
    %v766 = vshrl.u32 %v765, 7
    %v767 = vsub.s32 %v764, %v766
    %v768 = vrot.slane %v761, %v767
    %v769 = vcombine.low %v744, %v752
    %v770 = vcombine.high %v744, %v752
    %v772 = vunpack.c.l.s4 1934713408
    %v773 = vunpack.c.0.s8 %v772
    %v774 = vlaneseq
    %v775 = vshrl.u32 %v774, 7
    %v776 = vsub.s32 %v773, %v775
    %v777 = vrot.slane %v769, %v776
    %v779 = vunpack.c.l.s4 1934713408
    %v780 = vunpack.c.0.s8 %v779
    %v781 = vlaneseq
    %v782 = vshrl.u32 %v781, 7
    %v783 = vsub.s32 %v780, %v782
    %v784 = vrot.slane %v770, %v783
    %v785 = vcombine.low %v760, %v768
    %v786 = vcombine.high %v760, %v768
    %v788 = vunpack.c.l.s4 1934713408
    %v789 = vunpack.c.0.s8 %v788
    %v790 = vlaneseq
    %v791 = vshrl.u32 %v790, 7
    %v792 = vsub.s32 %v789, %v791
    %v793 = vrot.slane %v785, %v792
    %v795 = vunpack.c.l.s4 1934713408
    %v796 = vunpack.c.0.s8 %v795
    %v797 = vlaneseq
    %v798 = vshrl.u32 %v797, 7
    %v799 = vsub.s32 %v796, %v798
    %v800 = vrot.slane %v786, %v799
    %v801 = vcombine.low %v777, %v793
    %v802 = vcombine.high %v777, %v793
    %v803 = vcombine.low %v784, %v800
    %v804 = vcombine.high %v784, %v800
    %v805 = vpack.c.bf16 %v733, %v733
    %v806 = vpack.c.bf16 %v734, %v734
    %v807 = vpack.c.bf16 %v735, %v735
    %v808 = vpack.c.bf16 %v736, %v736
    %v809 = vpack.c.bf16 %v801, %v801
    %v810 = vpack.c.bf16 %v802, %v802
    %v811 = vpack.c.bf16 %v803, %v803
    %v812 = vpack.c.bf16 %v804, %v804
    %813 = vrot.lane.b32.xlu0 %v203, 64
    %v814 = vpop.permute.xlu0 %813
    %815 = vrot.lane.b32.xlu0 %v206, 64
    %v816 = vpop.permute.xlu0 %815
    %817 = vrot.lane.b32.xlu0 %v212, 64
    %v818 = vpop.permute.xlu0 %817
    %819 = vrot.lane.b32.xlu0 %v214, 64
    %v820 = vpop.permute.xlu0 %819
    %821 = vrot.lane.b32.xlu0 %v218, 64
    %v822 = vpop.permute.xlu0 %821
    %823 = vrot.lane.b32.xlu0 %v220, 64
    %v824 = vpop.permute.xlu0 %823
    %825 = vrot.lane.b32.xlu0 %v224, 64
    %v826 = vpop.permute.xlu0 %825
    %827 = vrot.lane.b32.xlu0 %v226, 64
    %v828 = vpop.permute.xlu0 %827
    %v837 = vcombine.low %v814, %v822
    %v838 = vcombine.high %v814, %v822
    %v840 = vunpack.c.l.s4 1983009808
    %v841 = vunpack.c.0.s8 %v840
    %v842 = vlaneseq
    %v843 = vshrl.u32 %v842, 7
    %v844 = vsub.s32 %v841, %v843
    %v845 = vrot.slane %v837, %v844
    %v847 = vunpack.c.l.s4 1983009808
    %v848 = vunpack.c.0.s8 %v847
    %v849 = vlaneseq
    %v850 = vshrl.u32 %v849, 7
    %v851 = vsub.s32 %v848, %v850
    %v852 = vrot.slane %v838, %v851
    %v853 = vcombine.low %v818, %v826
    %v854 = vcombine.high %v818, %v826
    %v856 = vunpack.c.l.s4 1983009808
    %v857 = vunpack.c.0.s8 %v856
    %v858 = vlaneseq
    %v859 = vshrl.u32 %v858, 7
    %v860 = vsub.s32 %v857, %v859
    %v861 = vrot.slane %v853, %v860
    %v863 = vunpack.c.l.s4 1983009808
    %v864 = vunpack.c.0.s8 %v863
    %v865 = vlaneseq
    %v866 = vshrl.u32 %v865, 7
    %v867 = vsub.s32 %v864, %v866
    %v868 = vrot.slane %v854, %v867
    %v869 = vcombine.low %v845, %v861
    %v870 = vcombine.high %v845, %v861
    %v872 = vunpack.c.l.s4 1934713408
    %v873 = vunpack.c.0.s8 %v872
    %v874 = vlaneseq
    %v875 = vshrl.u32 %v874, 7
    %v876 = vsub.s32 %v873, %v875
    %v877 = vrot.slane %v869, %v876
    %v879 = vunpack.c.l.s4 1934713408
    %v880 = vunpack.c.0.s8 %v879
    %v881 = vlaneseq
    %v882 = vshrl.u32 %v881, 7
    %v883 = vsub.s32 %v880, %v882
    %v884 = vrot.slane %v870, %v883
    %v885 = vcombine.low %v852, %v868
    %v886 = vcombine.high %v852, %v868
    %v888 = vunpack.c.l.s4 1934713408
    %v889 = vunpack.c.0.s8 %v888
    %v890 = vlaneseq
    %v891 = vshrl.u32 %v890, 7
    %v892 = vsub.s32 %v889, %v891
    %v893 = vrot.slane %v885, %v892
    %v895 = vunpack.c.l.s4 1934713408
    %v896 = vunpack.c.0.s8 %v895
    %v897 = vlaneseq
    %v898 = vshrl.u32 %v897, 7
    %v899 = vsub.s32 %v896, %v898
    %v900 = vrot.slane %v886, %v899
    %v901 = vcombine.high %v877, 0.0
    %v902 = vcombine.high %v884, 0.0
    %v903 = vcombine.high %v893, 0.0
    %v904 = vcombine.high %v900, 0.0
    %v905 = vcombine.low %v816, %v824
    %v906 = vcombine.high %v816, %v824
    %v908 = vunpack.c.l.s4 1983009808
    %v909 = vunpack.c.0.s8 %v908
    %v910 = vlaneseq
    %v911 = vshrl.u32 %v910, 7
    %v912 = vsub.s32 %v909, %v911
    %v913 = vrot.slane %v905, %v912
    %v915 = vunpack.c.l.s4 1983009808
    %v916 = vunpack.c.0.s8 %v915
    %v917 = vlaneseq
    %v918 = vshrl.u32 %v917, 7
    %v919 = vsub.s32 %v916, %v918
    %v920 = vrot.slane %v906, %v919
    %v921 = vcombine.low %v820, %v828
    %v922 = vcombine.high %v820, %v828
    %v924 = vunpack.c.l.s4 1983009808
    %v925 = vunpack.c.0.s8 %v924
    %v926 = vlaneseq
    %v927 = vshrl.u32 %v926, 7
    %v928 = vsub.s32 %v925, %v927
    %v929 = vrot.slane %v921, %v928
    %v931 = vunpack.c.l.s4 1983009808
    %v932 = vunpack.c.0.s8 %v931
    %v933 = vlaneseq
    %v934 = vshrl.u32 %v933, 7
    %v935 = vsub.s32 %v932, %v934
    %v936 = vrot.slane %v922, %v935
    %v937 = vcombine.low %v913, %v929
    %v938 = vcombine.high %v913, %v929
    %v940 = vunpack.c.l.s4 1934713408
    %v941 = vunpack.c.0.s8 %v940
    %v942 = vlaneseq
    %v943 = vshrl.u32 %v942, 7
    %v944 = vsub.s32 %v941, %v943
    %v945 = vrot.slane %v937, %v944
    %v947 = vunpack.c.l.s4 1934713408
    %v948 = vunpack.c.0.s8 %v947
    %v949 = vlaneseq
    %v950 = vshrl.u32 %v949, 7
    %v951 = vsub.s32 %v948, %v950
    %v952 = vrot.slane %v938, %v951
    %v953 = vcombine.low %v920, %v936
    %v954 = vcombine.high %v920, %v936
    %v956 = vunpack.c.l.s4 1934713408
    %v957 = vunpack.c.0.s8 %v956
    %v958 = vlaneseq
    %v959 = vshrl.u32 %v958, 7
    %v960 = vsub.s32 %v957, %v959
    %v961 = vrot.slane %v953, %v960
    %v963 = vunpack.c.l.s4 1934713408
    %v964 = vunpack.c.0.s8 %v963
    %v965 = vlaneseq
    %v966 = vshrl.u32 %v965, 7
    %v967 = vsub.s32 %v964, %v966
    %v968 = vrot.slane %v954, %v967
    %v969 = vcombine.high %v945, 0.0
    %v970 = vcombine.high %v952, 0.0
    %v971 = vcombine.high %v961, 0.0
    %v972 = vcombine.high %v968, 0.0
    %v973 = vcombine.low %v877, %v884
    %v975 = vunpack.c.l.s4 1983009808
    %v976 = vunpack.c.0.s8 %v975
    %v977 = vlaneseq
    %v978 = vshrl.u32 %v977, 7
    %v979 = vsub.s32 %v976, %v978
    %v980 = vrot.slane %v973, %v979
    %v981 = vcombine.low %v901, %v902
    %v983 = vunpack.c.l.s4 1983009808
    %v984 = vunpack.c.0.s8 %v983
    %v985 = vlaneseq
    %v986 = vshrl.u32 %v985, 7
    %v987 = vsub.s32 %v984, %v986
    %v988 = vrot.slane %v981, %v987
    %v989 = vcombine.low %v893, %v900
    %v991 = vunpack.c.l.s4 1983009808
    %v992 = vunpack.c.0.s8 %v991
    %v993 = vlaneseq
    %v994 = vshrl.u32 %v993, 7
    %v995 = vsub.s32 %v992, %v994
    %v996 = vrot.slane %v989, %v995
    %v997 = vcombine.low %v903, %v904
    %v999 = vunpack.c.l.s4 1983009808
    %v1000 = vunpack.c.0.s8 %v999
    %v1001 = vlaneseq
    %v1002 = vshrl.u32 %v1001, 7
    %v1003 = vsub.s32 %v1000, %v1002
    %v1004 = vrot.slane %v997, %v1003
    %v1005 = vcombine.low %v980, %v988
    %v1006 = vcombine.high %v980, %v988
    %v1008 = vunpack.c.l.s4 1934713408
    %v1009 = vunpack.c.0.s8 %v1008
    %v1010 = vlaneseq
    %v1011 = vshrl.u32 %v1010, 7
    %v1012 = vsub.s32 %v1009, %v1011
    %v1013 = vrot.slane %v1005, %v1012
    %v1015 = vunpack.c.l.s4 1934713408
    %v1016 = vunpack.c.0.s8 %v1015
    %v1017 = vlaneseq
    %v1018 = vshrl.u32 %v1017, 7
    %v1019 = vsub.s32 %v1016, %v1018
    %v1020 = vrot.slane %v1006, %v1019
    %v1021 = vcombine.low %v996, %v1004
    %v1022 = vcombine.high %v996, %v1004
    %v1024 = vunpack.c.l.s4 1934713408
    %v1025 = vunpack.c.0.s8 %v1024
    %v1026 = vlaneseq
    %v1027 = vshrl.u32 %v1026, 7
    %v1028 = vsub.s32 %v1025, %v1027
    %v1029 = vrot.slane %v1021, %v1028
    %v1031 = vunpack.c.l.s4 1934713408
    %v1032 = vunpack.c.0.s8 %v1031
    %v1033 = vlaneseq
    %v1034 = vshrl.u32 %v1033, 7
    %v1035 = vsub.s32 %v1032, %v1034
    %v1036 = vrot.slane %v1022, %v1035
    %v1037 = vcombine.low %v1013, %v1029
    %v1038 = vcombine.high %v1013, %v1029
    %v1039 = vcombine.low %v1020, %v1036
    %v1040 = vcombine.high %v1020, %v1036
    %v1041 = vcombine.low %v945, %v952
    %v1043 = vunpack.c.l.s4 1983009808
    %v1044 = vunpack.c.0.s8 %v1043
    %v1045 = vlaneseq
    %v1046 = vshrl.u32 %v1045, 7
    %v1047 = vsub.s32 %v1044, %v1046
    %v1048 = vrot.slane %v1041, %v1047
    %v1049 = vcombine.low %v969, %v970
    %v1051 = vunpack.c.l.s4 1983009808
    %v1052 = vunpack.c.0.s8 %v1051
    %v1053 = vlaneseq
    %v1054 = vshrl.u32 %v1053, 7
    %v1055 = vsub.s32 %v1052, %v1054
    %v1056 = vrot.slane %v1049, %v1055
    %v1057 = vcombine.low %v961, %v968
    %v1059 = vunpack.c.l.s4 1983009808
    %v1060 = vunpack.c.0.s8 %v1059
    %v1061 = vlaneseq
    %v1062 = vshrl.u32 %v1061, 7
    %v1063 = vsub.s32 %v1060, %v1062
    %v1064 = vrot.slane %v1057, %v1063
    %v1065 = vcombine.low %v971, %v972
    %v1067 = vunpack.c.l.s4 1983009808
    %v1068 = vunpack.c.0.s8 %v1067
    %v1069 = vlaneseq
    %v1070 = vshrl.u32 %v1069, 7
    %v1071 = vsub.s32 %v1068, %v1070
    %v1072 = vrot.slane %v1065, %v1071
    %v1073 = vcombine.low %v1048, %v1056
    %v1074 = vcombine.high %v1048, %v1056
    %v1076 = vunpack.c.l.s4 1934713408
    %v1077 = vunpack.c.0.s8 %v1076
    %v1078 = vlaneseq
    %v1079 = vshrl.u32 %v1078, 7
    %v1080 = vsub.s32 %v1077, %v1079
    %v1081 = vrot.slane %v1073, %v1080
    %v1083 = vunpack.c.l.s4 1934713408
    %v1084 = vunpack.c.0.s8 %v1083
    %v1085 = vlaneseq
    %v1086 = vshrl.u32 %v1085, 7
    %v1087 = vsub.s32 %v1084, %v1086
    %v1088 = vrot.slane %v1074, %v1087
    %v1089 = vcombine.low %v1064, %v1072
    %v1090 = vcombine.high %v1064, %v1072
    %v1092 = vunpack.c.l.s4 1934713408
    %v1093 = vunpack.c.0.s8 %v1092
    %v1094 = vlaneseq
    %v1095 = vshrl.u32 %v1094, 7
    %v1096 = vsub.s32 %v1093, %v1095
    %v1097 = vrot.slane %v1089, %v1096
    %v1099 = vunpack.c.l.s4 1934713408
    %v1100 = vunpack.c.0.s8 %v1099
    %v1101 = vlaneseq
    %v1102 = vshrl.u32 %v1101, 7
    %v1103 = vsub.s32 %v1100, %v1102
    %v1104 = vrot.slane %v1090, %v1103
    %v1105 = vcombine.low %v1081, %v1097
    %v1106 = vcombine.high %v1081, %v1097
    %v1107 = vcombine.low %v1088, %v1104
    %v1108 = vcombine.high %v1088, %v1104
    %v1109 = vpack.c.bf16 %v1037, %v1037
    %v1110 = vpack.c.bf16 %v1038, %v1038
    %v1111 = vpack.c.bf16 %v1039, %v1039
    %v1112 = vpack.c.bf16 %v1040, %v1040
    %v1113 = vpack.c.bf16 %v1105, %v1105
    %v1114 = vpack.c.bf16 %v1106, %v1106
    %v1115 = vpack.c.bf16 %v1107, %v1107
    %v1116 = vpack.c.bf16 %v1108, %v1108
    %vm1117 = vcmask 64512
    %v1119 = vsel %vm1117, %v501, 0
    %v1122 = vsel %vm1117, %v805, 0
    %1124 = vmatprep.subr.bf16.mxu0 0
    %1125 = vmatpush1.bf16.xpose.msra.mxu0 %v1122
    %1126 = vmatprep.subr.bf16.mxu0 0
    %1127 = vmatpush1.bf16.xpose.msra.mxu0 0
    %1128 = vmatprep.subr.bf16.mxu0 0
    %1129 = vmatpush1.bf16.xpose.msra.mxu0 0
    %1130 = vmatprep.subr.bf16.mxu0 0
    %1131 = vmatpush1.bf16.xpose.msra.mxu0 0
    %1132 = vmatprep.subr.bf16.mxu0 0
    %1133 = vmatpush1.bf16.xpose.msra.mxu0 0
    %1134 = vmatprep.subr.bf16.mxu0 0
    %1135 = vmatpush1.bf16.xpose.msra.mxu0 0
    %1136 = vmatprep.subr.bf16.mxu0 0
    %1137 = vmatpush1.bf16.xpose.msra.mxu0 0
    %1138 = vmatprep.subr.bf16.mxu0 0
    %1139 = vmatpush1.bf16.xpose.msra.mxu0 0
    %1140 = vmatprep.subr.bf16.mxu0 0
    %1141 = vmatpush1.bf16.xpose.msra.mxu0 0
    %1142 = vmatprep.subr.bf16.mxu0 0
    %1143 = vmatpush1.bf16.xpose.msra.mxu0 0
    %1144 = vmatprep.subr.bf16.mxu0 0
    %1145 = vmatpush1.bf16.xpose.msra.mxu0 0
    %1146 = vmatprep.subr.bf16.mxu0 0
    %1147 = vmatpush1.bf16.xpose.msra.mxu0 0
    %1148 = vmatprep.subr.bf16.mxu0 0
    %1149 = vmatpush1.bf16.xpose.msra.mxu0 0
    %1150 = vmatprep.subr.bf16.mxu0 0
    %1151 = vmatpush1.bf16.xpose.msra.mxu0 0
    %1152 = vmatprep.subr.bf16.mxu0 0
    %1153 = vmatpush1.bf16.xpose.msra.mxu0 0
    %1154 = vmatprep.subr.bf16.mxu0 0
    %1155 = vmatpush1.bf16.xpose.msra.mxu0 0
    %1156 = vmatprep.mubr.bf16.mxu0 0
    %1157 = vmatmul.mubr.bf16.gmra.mrb[0].mxu0 %v1119
    %v1158 = vpop.f32.mrb[0].mxu0
    %v1159 = vadd.f32 0.0, %v1158
    %v1160 = vpop.f32.mrb[0].mxu0
    %v1161 = vpop.f32.mrb[0].mxu0
    %v1162 = vpop.f32.mrb[0].mxu0
    %1163 = vdwg.mxu0
    %v1165 = vsel %vm1117, %v502, 0
    %v1168 = vsel %vm1117, %v806, 0
    %1170 = vmatprep.subr.bf16.mxu0 0
    %1171 = vmatpush1.bf16.xpose.msra.mxu0 %v1168
    %1172 = vmatprep.subr.bf16.mxu0 0
    %1173 = vmatpush1.bf16.xpose.msra.mxu0 0
    %1174 = vmatprep.subr.bf16.mxu0 0
    %1175 = vmatpush1.bf16.xpose.msra.mxu0 0
    %1176 = vmatprep.subr.bf16.mxu0 0
    %1177 = vmatpush1.bf16.xpose.msra.mxu0 0
    %1178 = vmatprep.subr.bf16.mxu0 0
    %1179 = vmatpush1.bf16.xpose.msra.mxu0 0
    %1180 = vmatprep.subr.bf16.mxu0 0
    %1181 = vmatpush1.bf16.xpose.msra.mxu0 0
    %1182 = vmatprep.subr.bf16.mxu0 0
    %1183 = vmatpush1.bf16.xpose.msra.mxu0 0
    %1184 = vmatprep.subr.bf16.mxu0 0
    %1185 = vmatpush1.bf16.xpose.msra.mxu0 0
    %1186 = vmatprep.subr.bf16.mxu0 0
    %1187 = vmatpush1.bf16.xpose.msra.mxu0 0
    %1188 = vmatprep.subr.bf16.mxu0 0
    %1189 = vmatpush1.bf16.xpose.msra.mxu0 0
    %1190 = vmatprep.subr.bf16.mxu0 0
    %1191 = vmatpush1.bf16.xpose.msra.mxu0 0
    %1192 = vmatprep.subr.bf16.mxu0 0
    %1193 = vmatpush1.bf16.xpose.msra.mxu0 0
    %1194 = vmatprep.subr.bf16.mxu0 0
    %1195 = vmatpush1.bf16.xpose.msra.mxu0 0
    %1196 = vmatprep.subr.bf16.mxu0 0
    %1197 = vmatpush1.bf16.xpose.msra.mxu0 0
    %1198 = vmatprep.subr.bf16.mxu0 0
    %1199 = vmatpush1.bf16.xpose.msra.mxu0 0
    %1200 = vmatprep.subr.bf16.mxu0 0
    %1201 = vmatpush1.bf16.xpose.msra.mxu0 0
    %1202 = vmatprep.mubr.bf16.mxu0 0
    %1203 = vmatmul.mubr.bf16.gmra.mrb[0].mxu0 %v1165
    %v1204 = vpop.f32.mrb[0].mxu0
    %v1205 = vadd.f32 0.0, %v1204
    %v1206 = vpop.f32.mrb[0].mxu0
    %v1207 = vpop.f32.mrb[0].mxu0
    %v1208 = vpop.f32.mrb[0].mxu0
    %1209 = vdwg.mxu0
    %v1211 = vsel %vm1117, %v503, 0
    %v1214 = vsel %vm1117, %v807, 0
    %1216 = vmatprep.subr.bf16.mxu0 0
    %1217 = vmatpush1.bf16.xpose.msra.mxu0 %v1214
    %1218 = vmatprep.subr.bf16.mxu0 0
    %1219 = vmatpush1.bf16.xpose.msra.mxu0 0
    %1220 = vmatprep.subr.bf16.mxu0 0
    %1221 = vmatpush1.bf16.xpose.msra.mxu0 0
    %1222 = vmatprep.subr.bf16.mxu0 0
    %1223 = vmatpush1.bf16.xpose.msra.mxu0 0
    %1224 = vmatprep.subr.bf16.mxu0 0
    %1225 = vmatpush1.bf16.xpose.msra.mxu0 0
    %1226 = vmatprep.subr.bf16.mxu0 0
    %1227 = vmatpush1.bf16.xpose.msra.mxu0 0
    %1228 = vmatprep.subr.bf16.mxu0 0
    %1229 = vmatpush1.bf16.xpose.msra.mxu0 0
    %1230 = vmatprep.subr.bf16.mxu0 0
    %1231 = vmatpush1.bf16.xpose.msra.mxu0 0
    %1232 = vmatprep.subr.bf16.mxu0 0
    %1233 = vmatpush1.bf16.xpose.msra.mxu0 0
    %1234 = vmatprep.subr.bf16.mxu0 0
    %1235 = vmatpush1.bf16.xpose.msra.mxu0 0
    %1236 = vmatprep.subr.bf16.mxu0 0
    %1237 = vmatpush1.bf16.xpose.msra.mxu0 0
    %1238 = vmatprep.subr.bf16.mxu0 0
    %1239 = vmatpush1.bf16.xpose.msra.mxu0 0
    %1240 = vmatprep.subr.bf16.mxu0 0
    %1241 = vmatpush1.bf16.xpose.msra.mxu0 0
    %1242 = vmatprep.subr.bf16.mxu0 0
    %1243 = vmatpush1.bf16.xpose.msra.mxu0 0
    %1244 = vmatprep.subr.bf16.mxu0 0
    %1245 = vmatpush1.bf16.xpose.msra.mxu0 0
    %1246 = vmatprep.subr.bf16.mxu0 0
    %1247 = vmatpush1.bf16.xpose.msra.mxu0 0
    %1248 = vmatprep.mubr.bf16.mxu0 0
    %1249 = vmatmul.mubr.bf16.gmra.mrb[0].mxu0 %v1211
    %v1250 = vpop.f32.mrb[0].mxu0
    %v1251 = vadd.f32 0.0, %v1250
    %v1252 = vpop.f32.mrb[0].mxu0
    %v1253 = vpop.f32.mrb[0].mxu0
    %v1254 = vpop.f32.mrb[0].mxu0
    %1255 = vdwg.mxu0
    %v1257 = vsel %vm1117, %v504, 0
    %v1260 = vsel %vm1117, %v808, 0
    %1262 = vmatprep.subr.bf16.mxu0 0
    %1263 = vmatpush1.bf16.xpose.msra.mxu0 %v1260
    %1264 = vmatprep.subr.bf16.mxu0 0
    %1265 = vmatpush1.bf16.xpose.msra.mxu0 0
    %1266 = vmatprep.subr.bf16.mxu0 0
    %1267 = vmatpush1.bf16.xpose.msra.mxu0 0
    %1268 = vmatprep.subr.bf16.mxu0 0
    %1269 = vmatpush1.bf16.xpose.msra.mxu0 0
    %1270 = vmatprep.subr.bf16.mxu0 0
    %1271 = vmatpush1.bf16.xpose.msra.mxu0 0
    %1272 = vmatprep.subr.bf16.mxu0 0
    %1273 = vmatpush1.bf16.xpose.msra.mxu0 0
    %1274 = vmatprep.subr.bf16.mxu0 0
    %1275 = vmatpush1.bf16.xpose.msra.mxu0 0
    %1276 = vmatprep.subr.bf16.mxu0 0
    %1277 = vmatpush1.bf16.xpose.msra.mxu0 0
    %1278 = vmatprep.subr.bf16.mxu0 0
    %1279 = vmatpush1.bf16.xpose.msra.mxu0 0
    %1280 = vmatprep.subr.bf16.mxu0 0
    %1281 = vmatpush1.bf16.xpose.msra.mxu0 0
    %1282 = vmatprep.subr.bf16.mxu0 0
    %1283 = vmatpush1.bf16.xpose.msra.mxu0 0
    %1284 = vmatprep.subr.bf16.mxu0 0
    %1285 = vmatpush1.bf16.xpose.msra.mxu0 0
    %1286 = vmatprep.subr.bf16.mxu0 0
    %1287 = vmatpush1.bf16.xpose.msra.mxu0 0
    %1288 = vmatprep.subr.bf16.mxu0 0
    %1289 = vmatpush1.bf16.xpose.msra.mxu0 0
    %1290 = vmatprep.subr.bf16.mxu0 0
    %1291 = vmatpush1.bf16.xpose.msra.mxu0 0
    %1292 = vmatprep.subr.bf16.mxu0 0
    %1293 = vmatpush1.bf16.xpose.msra.mxu0 0
    %1294 = vmatprep.mubr.bf16.mxu0 0
    %1295 = vmatmul.mubr.bf16.gmra.mrb[0].mxu0 %v1257
    %v1296 = vpop.f32.mrb[0].mxu0
    %v1297 = vadd.f32 0.0, %v1296
    %v1298 = vpop.f32.mrb[0].mxu0
    %v1299 = vpop.f32.mrb[0].mxu0
    %v1300 = vpop.f32.mrb[0].mxu0
    %1301 = vdwg.mxu0
    %v1303 = vsel %vm1117, %v505, 0
    %v1306 = vsel %vm1117, %v809, 0
    %1308 = vmatprep.subr.bf16.mxu0 0
    %1309 = vmatpush1.bf16.xpose.msra.mxu0 %v1306
    %1310 = vmatprep.subr.bf16.mxu0 0
    %1311 = vmatpush1.bf16.xpose.msra.mxu0 0
    %1312 = vmatprep.subr.bf16.mxu0 0
    %1313 = vmatpush1.bf16.xpose.msra.mxu0 0
    %1314 = vmatprep.subr.bf16.mxu0 0
    %1315 = vmatpush1.bf16.xpose.msra.mxu0 0
    %1316 = vmatprep.subr.bf16.mxu0 0
    %1317 = vmatpush1.bf16.xpose.msra.mxu0 0
    %1318 = vmatprep.subr.bf16.mxu0 0
    %1319 = vmatpush1.bf16.xpose.msra.mxu0 0
    %1320 = vmatprep.subr.bf16.mxu0 0
    %1321 = vmatpush1.bf16.xpose.msra.mxu0 0
    %1322 = vmatprep.subr.bf16.mxu0 0
    %1323 = vmatpush1.bf16.xpose.msra.mxu0 0
    %1324 = vmatprep.subr.bf16.mxu0 0
    %1325 = vmatpush1.bf16.xpose.msra.mxu0 0
    %1326 = vmatprep.subr.bf16.mxu0 0
    %1327 = vmatpush1.bf16.xpose.msra.mxu0 0
    %1328 = vmatprep.subr.bf16.mxu0 0
    %1329 = vmatpush1.bf16.xpose.msra.mxu0 0
    %1330 = vmatprep.subr.bf16.mxu0 0
    %1331 = vmatpush1.bf16.xpose.msra.mxu0 0
    %1332 = vmatprep.subr.bf16.mxu0 0
    %1333 = vmatpush1.bf16.xpose.msra.mxu0 0
    %1334 = vmatprep.subr.bf16.mxu0 0
    %1335 = vmatpush1.bf16.xpose.msra.mxu0 0
    %1336 = vmatprep.subr.bf16.mxu0 0
    %1337 = vmatpush1.bf16.xpose.msra.mxu0 0
    %1338 = vmatprep.subr.bf16.mxu0 0
    %1339 = vmatpush1.bf16.xpose.msra.mxu0 0
    %1340 = vmatprep.mubr.bf16.mxu0 0
    %1341 = vmatmul.mubr.bf16.gmra.mrb[0].mxu0 %v1303
    %v1342 = vpop.f32.mrb[0].mxu0
    %v1343 = vadd.f32 0.0, %v1342
    %v1344 = vpop.f32.mrb[0].mxu0
    %v1345 = vpop.f32.mrb[0].mxu0
    %v1346 = vpop.f32.mrb[0].mxu0
    %1347 = vdwg.mxu0
    %v1349 = vsel %vm1117, %v506, 0
    %v1352 = vsel %vm1117, %v810, 0
    %1354 = vmatprep.subr.bf16.mxu0 0
    %1355 = vmatpush1.bf16.xpose.msra.mxu0 %v1352
    %1356 = vmatprep.subr.bf16.mxu0 0
    %1357 = vmatpush1.bf16.xpose.msra.mxu0 0
    %1358 = vmatprep.subr.bf16.mxu0 0
    %1359 = vmatpush1.bf16.xpose.msra.mxu0 0
    %1360 = vmatprep.subr.bf16.mxu0 0
    %1361 = vmatpush1.bf16.xpose.msra.mxu0 0
    %1362 = vmatprep.subr.bf16.mxu0 0
    %1363 = vmatpush1.bf16.xpose.msra.mxu0 0
    %1364 = vmatprep.subr.bf16.mxu0 0
    %1365 = vmatpush1.bf16.xpose.msra.mxu0 0
    %1366 = vmatprep.subr.bf16.mxu0 0
    %1367 = vmatpush1.bf16.xpose.msra.mxu0 0
    %1368 = vmatprep.subr.bf16.mxu0 0
    %1369 = vmatpush1.bf16.xpose.msra.mxu0 0
    %1370 = vmatprep.subr.bf16.mxu0 0
    %1371 = vmatpush1.bf16.xpose.msra.mxu0 0
    %1372 = vmatprep.subr.bf16.mxu0 0
    %1373 = vmatpush1.bf16.xpose.msra.mxu0 0
    %1374 = vmatprep.subr.bf16.mxu0 0
    %1375 = vmatpush1.bf16.xpose.msra.mxu0 0
    %1376 = vmatprep.subr.bf16.mxu0 0
    %1377 = vmatpush1.bf16.xpose.msra.mxu0 0
    %1378 = vmatprep.subr.bf16.mxu0 0
    %1379 = vmatpush1.bf16.xpose.msra.mxu0 0
    %1380 = vmatprep.subr.bf16.mxu0 0
    %1381 = vmatpush1.bf16.xpose.msra.mxu0 0
    %1382 = vmatprep.subr.bf16.mxu0 0
    %1383 = vmatpush1.bf16.xpose.msra.mxu0 0
    %1384 = vmatprep.subr.bf16.mxu0 0
    %1385 = vmatpush1.bf16.xpose.msra.mxu0 0
    %1386 = vmatprep.mubr.bf16.mxu0 0
    %1387 = vmatmul.mubr.bf16.gmra.mrb[0].mxu0 %v1349
    %v1388 = vpop.f32.mrb[0].mxu0
    %v1389 = vadd.f32 0.0, %v1388
    %v1390 = vpop.f32.mrb[0].mxu0
    %v1391 = vpop.f32.mrb[0].mxu0
    %v1392 = vpop.f32.mrb[0].mxu0
    %1393 = vdwg.mxu0
    %v1395 = vsel %vm1117, %v507, 0
    %v1398 = vsel %vm1117, %v811, 0
    %1400 = vmatprep.subr.bf16.mxu0 0
    %1401 = vmatpush1.bf16.xpose.msra.mxu0 %v1398
    %1402 = vmatprep.subr.bf16.mxu0 0
    %1403 = vmatpush1.bf16.xpose.msra.mxu0 0
    %1404 = vmatprep.subr.bf16.mxu0 0
    %1405 = vmatpush1.bf16.xpose.msra.mxu0 0
    %1406 = vmatprep.subr.bf16.mxu0 0
    %1407 = vmatpush1.bf16.xpose.msra.mxu0 0
    %1408 = vmatprep.subr.bf16.mxu0 0
    %1409 = vmatpush1.bf16.xpose.msra.mxu0 0
    %1410 = vmatprep.subr.bf16.mxu0 0
    %1411 = vmatpush1.bf16.xpose.msra.mxu0 0
    %1412 = vmatprep.subr.bf16.mxu0 0
    %1413 = vmatpush1.bf16.xpose.msra.mxu0 0
    %1414 = vmatprep.subr.bf16.mxu0 0
    %1415 = vmatpush1.bf16.xpose.msra.mxu0 0
    %1416 = vmatprep.subr.bf16.mxu0 0
    %1417 = vmatpush1.bf16.xpose.msra.mxu0 0
    %1418 = vmatprep.subr.bf16.mxu0 0
    %1419 = vmatpush1.bf16.xpose.msra.mxu0 0
    %1420 = vmatprep.subr.bf16.mxu0 0
    %1421 = vmatpush1.bf16.xpose.msra.mxu0 0
    %1422 = vmatprep.subr.bf16.mxu0 0
    %1423 = vmatpush1.bf16.xpose.msra.mxu0 0
    %1424 = vmatprep.subr.bf16.mxu0 0
    %1425 = vmatpush1.bf16.xpose.msra.mxu0 0
    %1426 = vmatprep.subr.bf16.mxu0 0
    %1427 = vmatpush1.bf16.xpose.msra.mxu0 0
    %1428 = vmatprep.subr.bf16.mxu0 0
    %1429 = vmatpush1.bf16.xpose.msra.mxu0 0
    %1430 = vmatprep.subr.bf16.mxu0 0
    %1431 = vmatpush1.bf16.xpose.msra.mxu0 0
    %1432 = vmatprep.mubr.bf16.mxu0 0
    %1433 = vmatmul.mubr.bf16.gmra.mrb[0].mxu0 %v1395
    %v1434 = vpop.f32.mrb[0].mxu0
    %v1435 = vadd.f32 0.0, %v1434
    %v1436 = vpop.f32.mrb[0].mxu0
    %v1437 = vpop.f32.mrb[0].mxu0
    %v1438 = vpop.f32.mrb[0].mxu0
    %1439 = vdwg.mxu0
    %v1441 = vsel %vm1117, %v508, 0
    %v1444 = vsel %vm1117, %v812, 0
    %1446 = vmatprep.subr.bf16.mxu0 0
    %1447 = vmatpush1.bf16.xpose.msra.mxu0 %v1444
    %1448 = vmatprep.subr.bf16.mxu0 0
    %1449 = vmatpush1.bf16.xpose.msra.mxu0 0
    %1450 = vmatprep.subr.bf16.mxu0 0
    %1451 = vmatpush1.bf16.xpose.msra.mxu0 0
    %1452 = vmatprep.subr.bf16.mxu0 0
    %1453 = vmatpush1.bf16.xpose.msra.mxu0 0
    %1454 = vmatprep.subr.bf16.mxu0 0
    %1455 = vmatpush1.bf16.xpose.msra.mxu0 0
    %1456 = vmatprep.subr.bf16.mxu0 0
    %1457 = vmatpush1.bf16.xpose.msra.mxu0 0
    %1458 = vmatprep.subr.bf16.mxu0 0
    %1459 = vmatpush1.bf16.xpose.msra.mxu0 0
    %1460 = vmatprep.subr.bf16.mxu0 0
    %1461 = vmatpush1.bf16.xpose.msra.mxu0 0
    %1462 = vmatprep.subr.bf16.mxu0 0
    %1463 = vmatpush1.bf16.xpose.msra.mxu0 0
    %1464 = vmatprep.subr.bf16.mxu0 0
    %1465 = vmatpush1.bf16.xpose.msra.mxu0 0
    %1466 = vmatprep.subr.bf16.mxu0 0
    %1467 = vmatpush1.bf16.xpose.msra.mxu0 0
    %1468 = vmatprep.subr.bf16.mxu0 0
    %1469 = vmatpush1.bf16.xpose.msra.mxu0 0
    %1470 = vmatprep.subr.bf16.mxu0 0
    %1471 = vmatpush1.bf16.xpose.msra.mxu0 0
    %1472 = vmatprep.subr.bf16.mxu0 0
    %1473 = vmatpush1.bf16.xpose.msra.mxu0 0
    %1474 = vmatprep.subr.bf16.mxu0 0
    %1475 = vmatpush1.bf16.xpose.msra.mxu0 0
    %1476 = vmatprep.subr.bf16.mxu0 0
    %1477 = vmatpush1.bf16.xpose.msra.mxu0 0
    %1478 = vmatprep.mubr.bf16.mxu0 0
    %1479 = vmatmul.mubr.bf16.gmra.mrb[0].mxu0 %v1441
    %v1480 = vpop.f32.mrb[0].mxu0
    %v1481 = vadd.f32 0.0, %v1480
    %v1482 = vpop.f32.mrb[0].mxu0
    %v1483 = vpop.f32.mrb[0].mxu0
    %v1484 = vpop.f32.mrb[0].mxu0
    %1485 = vdwg.mxu0
    %v1486 = vsel %vm1117, %v1159, -inf
    %1487 = vmax.xlane.f32.xlu0 %v1486
    %v1488 = vpop.xlane.xlu0 %1487
    %v1489 = vsel %vm1117, %v1205, -inf
    %1490 = vmax.xlane.f32.xlu0 %v1489
    %v1491 = vpop.xlane.xlu0 %1490
    %v1492 = vsel %vm1117, %v1251, -inf
    %1493 = vmax.xlane.f32.xlu0 %v1492
    %v1494 = vpop.xlane.xlu0 %1493
    %v1495 = vsel %vm1117, %v1297, -inf
    %1496 = vmax.xlane.f32.xlu0 %v1495
    %v1497 = vpop.xlane.xlu0 %1496
    %v1498 = vsel %vm1117, %v1343, -inf
    %1499 = vmax.xlane.f32.xlu0 %v1498
    %v1500 = vpop.xlane.xlu0 %1499
    %v1501 = vsel %vm1117, %v1389, -inf
    %1502 = vmax.xlane.f32.xlu0 %v1501
    %v1503 = vpop.xlane.xlu0 %1502
    %v1504 = vsel %vm1117, %v1435, -inf
    %1505 = vmax.xlane.f32.xlu0 %v1504
    %v1506 = vpop.xlane.xlu0 %1505
    %v1507 = vsel %vm1117, %v1481, -inf
    %1508 = vmax.xlane.f32.xlu0 %v1507
    %v1509 = vpop.xlane.xlu0 %1508
    %v1510 = vsub.f32 %v1159, %v1488
    %v1511 = vsub.f32 %v1205, %v1491
    %v1512 = vsub.f32 %v1251, %v1494
    %v1513 = vsub.f32 %v1297, %v1497
    %v1514 = vsub.f32 %v1343, %v1500
    %v1515 = vsub.f32 %v1389, %v1503
    %v1516 = vsub.f32 %v1435, %v1506
    %v1517 = vsub.f32 %v1481, %v1509
    %v1518 = vmul.f32 %v1510, 1.442695
    %v1519 = vpow.pop %v1518
    %v1520 = vmul.f32 %v1511, 1.442695
    %v1521 = vpow.pop %v1520
    %v1522 = vmul.f32 %v1512, 1.442695
    %v1523 = vpow.pop %v1522
    %v1524 = vmul.f32 %v1513, 1.442695
    %v1525 = vpow.pop %v1524
    %v1526 = vmul.f32 %v1514, 1.442695
    %v1527 = vpow.pop %v1526
    %v1528 = vmul.f32 %v1515, 1.442695
    %v1529 = vpow.pop %v1528
    %v1530 = vmul.f32 %v1516, 1.442695
    %v1531 = vpow.pop %v1530
    %v1532 = vmul.f32 %v1517, 1.442695
    %v1533 = vpow.pop %v1532
    %v1534 = vsel %vm1117, %v1519, 0.0
    %1535 = vadd.xlane.f32.xlu0 %v1534
    %v1536 = vpop.xlane.xlu0 %1535
    %v1537 = vsel %vm1117, %v1521, 0.0
    %1538 = vadd.xlane.f32.xlu0 %v1537
    %v1539 = vpop.xlane.xlu0 %1538
    %v1540 = vsel %vm1117, %v1523, 0.0
    %1541 = vadd.xlane.f32.xlu0 %v1540
    %v1542 = vpop.xlane.xlu0 %1541
    %v1543 = vsel %vm1117, %v1525, 0.0
    %1544 = vadd.xlane.f32.xlu0 %v1543
    %v1545 = vpop.xlane.xlu0 %1544
    %v1546 = vsel %vm1117, %v1527, 0.0
    %1547 = vadd.xlane.f32.xlu0 %v1546
    %v1548 = vpop.xlane.xlu0 %1547
    %v1549 = vsel %vm1117, %v1529, 0.0
    %1550 = vadd.xlane.f32.xlu0 %v1549
    %v1551 = vpop.xlane.xlu0 %1550
    %v1552 = vsel %vm1117, %v1531, 0.0
    %1553 = vadd.xlane.f32.xlu0 %v1552
    %v1554 = vpop.xlane.xlu0 %1553
    %v1555 = vsel %vm1117, %v1533, 0.0
    %1556 = vadd.xlane.f32.xlu0 %v1555
    %v1557 = vpop.xlane.xlu0 %1556
    %v1558 = vrcp.pop %v1536
    %v1559 = vrcp.pop %v1539
    %v1560 = vrcp.pop %v1542
    %v1561 = vrcp.pop %v1545
    %v1562 = vrcp.pop %v1548
    %v1563 = vrcp.pop %v1551
    %v1564 = vrcp.pop %v1554
    %v1565 = vrcp.pop %v1557
    %v1566 = vmul.f32 %v1519, %v1558
    %v1567 = vmul.f32 %v1521, %v1559
    %v1568 = vmul.f32 %v1523, %v1560
    %v1569 = vmul.f32 %v1525, %v1561
    %v1570 = vmul.f32 %v1527, %v1562
    %v1571 = vmul.f32 %v1529, %v1563
    %v1572 = vmul.f32 %v1531, %v1564
    %v1573 = vmul.f32 %v1533, %v1565
    %v1574 = vpack.c.bf16 %v1566, %v1566
    %v1575 = vpack.c.bf16 %v1567, %v1567
    %v1576 = vpack.c.bf16 %v1568, %v1568
    %v1577 = vpack.c.bf16 %v1569, %v1569
    %v1578 = vpack.c.bf16 %v1570, %v1570
    %v1579 = vpack.c.bf16 %v1571, %v1571
    %v1580 = vpack.c.bf16 %v1572, %v1572
    %v1581 = vpack.c.bf16 %v1573, %v1573
    %v1583 = vsel %vm1117, %v1574, 0
    %vm1585 = vcmask 1043456
    %v1587 = vsel %vm1585, %v1109, 0
    %1589 = vmatprep.subr.bf16.mxu0 0
    %1590 = vmatpush1.bf16.msra.mxu0 %v1587
    %1591 = vmatprep.subr.bf16.mxu0 0
    %1592 = vmatpush1.bf16.msra.mxu0 0
    %1593 = vmatprep.subr.bf16.mxu0 0
    %1594 = vmatpush1.bf16.msra.mxu0 0
    %1595 = vmatprep.subr.bf16.mxu0 0
    %1596 = vmatpush1.bf16.msra.mxu0 0
    %1597 = vmatprep.subr.bf16.mxu0 0
    %1598 = vmatpush1.bf16.msra.mxu0 0
    %1599 = vmatprep.subr.bf16.mxu0 0
    %1600 = vmatpush1.bf16.msra.mxu0 0
    %1601 = vmatprep.subr.bf16.mxu0 0
    %1602 = vmatpush1.bf16.msra.mxu0 0
    %1603 = vmatprep.subr.bf16.mxu0 0
    %1604 = vmatpush1.bf16.msra.mxu0 0
    %1605 = vmatprep.subr.bf16.mxu0 0
    %1606 = vmatpush1.bf16.msra.mxu0 0
    %1607 = vmatprep.subr.bf16.mxu0 0
    %1608 = vmatpush1.bf16.msra.mxu0 0
    %1609 = vmatprep.subr.bf16.mxu0 0
    %1610 = vmatpush1.bf16.msra.mxu0 0
    %1611 = vmatprep.subr.bf16.mxu0 0
    %1612 = vmatpush1.bf16.msra.mxu0 0
    %1613 = vmatprep.subr.bf16.mxu0 0
    %1614 = vmatpush1.bf16.msra.mxu0 0
    %1615 = vmatprep.subr.bf16.mxu0 0
    %1616 = vmatpush1.bf16.msra.mxu0 0
    %1617 = vmatprep.subr.bf16.mxu0 0
    %1618 = vmatpush1.bf16.msra.mxu0 0
    %1619 = vmatprep.subr.bf16.mxu0 0
    %1620 = vmatpush1.bf16.msra.mxu0 0
    %1621 = vmatprep.mubr.bf16.mxu0 0
    %1622 = vmatmul.mubr.bf16.gmra.mrb[0].mxu0 %v1583
    %v1623 = vpop.f32.mrb[0].mxu0
    %v1624 = vadd.f32 0.0, %v1623
    %v1625 = vpop.f32.mrb[0].mxu0
    %v1626 = vpop.f32.mrb[0].mxu0
    %v1627 = vpop.f32.mrb[0].mxu0
    %1628 = vdwg.mxu0
    %v1630 = vsel %vm1117, %v1575, 0
    %v1633 = vsel %vm1585, %v1110, 0
    %1635 = vmatprep.subr.bf16.mxu0 0
    %1636 = vmatpush1.bf16.msra.mxu0 %v1633
    %1637 = vmatprep.subr.bf16.mxu0 0
    %1638 = vmatpush1.bf16.msra.mxu0 0
    %1639 = vmatprep.subr.bf16.mxu0 0
    %1640 = vmatpush1.bf16.msra.mxu0 0
    %1641 = vmatprep.subr.bf16.mxu0 0
    %1642 = vmatpush1.bf16.msra.mxu0 0
    %1643 = vmatprep.subr.bf16.mxu0 0
    %1644 = vmatpush1.bf16.msra.mxu0 0
    %1645 = vmatprep.subr.bf16.mxu0 0
    %1646 = vmatpush1.bf16.msra.mxu0 0
    %1647 = vmatprep.subr.bf16.mxu0 0
    %1648 = vmatpush1.bf16.msra.mxu0 0
    %1649 = vmatprep.subr.bf16.mxu0 0
    %1650 = vmatpush1.bf16.msra.mxu0 0
    %1651 = vmatprep.subr.bf16.mxu0 0
    %1652 = vmatpush1.bf16.msra.mxu0 0
    %1653 = vmatprep.subr.bf16.mxu0 0
    %1654 = vmatpush1.bf16.msra.mxu0 0
    %1655 = vmatprep.subr.bf16.mxu0 0
    %1656 = vmatpush1.bf16.msra.mxu0 0
    %1657 = vmatprep.subr.bf16.mxu0 0
    %1658 = vmatpush1.bf16.msra.mxu0 0
    %1659 = vmatprep.subr.bf16.mxu0 0
    %1660 = vmatpush1.bf16.msra.mxu0 0
    %1661 = vmatprep.subr.bf16.mxu0 0
    %1662 = vmatpush1.bf16.msra.mxu0 0
    %1663 = vmatprep.subr.bf16.mxu0 0
    %1664 = vmatpush1.bf16.msra.mxu0 0
    %1665 = vmatprep.subr.bf16.mxu0 0
    %1666 = vmatpush1.bf16.msra.mxu0 0
    %1667 = vmatprep.mubr.bf16.mxu0 0
    %1668 = vmatmul.mubr.bf16.gmra.mrb[0].mxu0 %v1630
    %v1669 = vpop.f32.mrb[0].mxu0
    %v1670 = vadd.f32 0.0, %v1669
    %v1671 = vpop.f32.mrb[0].mxu0
    %v1672 = vpop.f32.mrb[0].mxu0
    %v1673 = vpop.f32.mrb[0].mxu0
    %1674 = vdwg.mxu0
    %v1676 = vsel %vm1117, %v1576, 0
    %v1679 = vsel %vm1585, %v1111, 0
    %1681 = vmatprep.subr.bf16.mxu0 0
    %1682 = vmatpush1.bf16.msra.mxu0 %v1679
    %1683 = vmatprep.subr.bf16.mxu0 0
    %1684 = vmatpush1.bf16.msra.mxu0 0
    %1685 = vmatprep.subr.bf16.mxu0 0
    %1686 = vmatpush1.bf16.msra.mxu0 0
    %1687 = vmatprep.subr.bf16.mxu0 0
    %1688 = vmatpush1.bf16.msra.mxu0 0
    %1689 = vmatprep.subr.bf16.mxu0 0
    %1690 = vmatpush1.bf16.msra.mxu0 0
    %1691 = vmatprep.subr.bf16.mxu0 0
    %1692 = vmatpush1.bf16.msra.mxu0 0
    %1693 = vmatprep.subr.bf16.mxu0 0
    %1694 = vmatpush1.bf16.msra.mxu0 0
    %1695 = vmatprep.subr.bf16.mxu0 0
    %1696 = vmatpush1.bf16.msra.mxu0 0
    %1697 = vmatprep.subr.bf16.mxu0 0
    %1698 = vmatpush1.bf16.msra.mxu0 0
    %1699 = vmatprep.subr.bf16.mxu0 0
    %1700 = vmatpush1.bf16.msra.mxu0 0
    %1701 = vmatprep.subr.bf16.mxu0 0
    %1702 = vmatpush1.bf16.msra.mxu0 0
    %1703 = vmatprep.subr.bf16.mxu0 0
    %1704 = vmatpush1.bf16.msra.mxu0 0
    %1705 = vmatprep.subr.bf16.mxu0 0
    %1706 = vmatpush1.bf16.msra.mxu0 0
    %1707 = vmatprep.subr.bf16.mxu0 0
    %1708 = vmatpush1.bf16.msra.mxu0 0
    %1709 = vmatprep.subr.bf16.mxu0 0
    %1710 = vmatpush1.bf16.msra.mxu0 0
    %1711 = vmatprep.subr.bf16.mxu0 0
    %1712 = vmatpush1.bf16.msra.mxu0 0
    %1713 = vmatprep.mubr.bf16.mxu0 0
    %1714 = vmatmul.mubr.bf16.gmra.mrb[0].mxu0 %v1676
    %v1715 = vpop.f32.mrb[0].mxu0
    %v1716 = vadd.f32 0.0, %v1715
    %v1717 = vpop.f32.mrb[0].mxu0
    %v1718 = vpop.f32.mrb[0].mxu0
    %v1719 = vpop.f32.mrb[0].mxu0
    %1720 = vdwg.mxu0
    %v1722 = vsel %vm1117, %v1577, 0
    %v1725 = vsel %vm1585, %v1112, 0
    %1727 = vmatprep.subr.bf16.mxu0 0
    %1728 = vmatpush1.bf16.msra.mxu0 %v1725
    %1729 = vmatprep.subr.bf16.mxu0 0
    %1730 = vmatpush1.bf16.msra.mxu0 0
    %1731 = vmatprep.subr.bf16.mxu0 0
    %1732 = vmatpush1.bf16.msra.mxu0 0
    %1733 = vmatprep.subr.bf16.mxu0 0
    %1734 = vmatpush1.bf16.msra.mxu0 0
    %1735 = vmatprep.subr.bf16.mxu0 0
    %1736 = vmatpush1.bf16.msra.mxu0 0
    %1737 = vmatprep.subr.bf16.mxu0 0
    %1738 = vmatpush1.bf16.msra.mxu0 0
    %1739 = vmatprep.subr.bf16.mxu0 0
    %1740 = vmatpush1.bf16.msra.mxu0 0
    %1741 = vmatprep.subr.bf16.mxu0 0
    %1742 = vmatpush1.bf16.msra.mxu0 0
    %1743 = vmatprep.subr.bf16.mxu0 0
    %1744 = vmatpush1.bf16.msra.mxu0 0
    %1745 = vmatprep.subr.bf16.mxu0 0
    %1746 = vmatpush1.bf16.msra.mxu0 0
    %1747 = vmatprep.subr.bf16.mxu0 0
    %1748 = vmatpush1.bf16.msra.mxu0 0
    %1749 = vmatprep.subr.bf16.mxu0 0
    %1750 = vmatpush1.bf16.msra.mxu0 0
    %1751 = vmatprep.subr.bf16.mxu0 0
    %1752 = vmatpush1.bf16.msra.mxu0 0
    %1753 = vmatprep.subr.bf16.mxu0 0
    %1754 = vmatpush1.bf16.msra.mxu0 0
    %1755 = vmatprep.subr.bf16.mxu0 0
    %1756 = vmatpush1.bf16.msra.mxu0 0
    %1757 = vmatprep.subr.bf16.mxu0 0
    %1758 = vmatpush1.bf16.msra.mxu0 0
    %1759 = vmatprep.mubr.bf16.mxu0 0
    %1760 = vmatmul.mubr.bf16.gmra.mrb[0].mxu0 %v1722
    %v1761 = vpop.f32.mrb[0].mxu0
    %v1762 = vadd.f32 0.0, %v1761
    %v1763 = vpop.f32.mrb[0].mxu0
    %v1764 = vpop.f32.mrb[0].mxu0
    %v1765 = vpop.f32.mrb[0].mxu0
    %1766 = vdwg.mxu0
    %v1768 = vsel %vm1117, %v1578, 0
    %v1771 = vsel %vm1585, %v1113, 0
    %1773 = vmatprep.subr.bf16.mxu0 0
    %1774 = vmatpush1.bf16.msra.mxu0 %v1771
    %1775 = vmatprep.subr.bf16.mxu0 0
    %1776 = vmatpush1.bf16.msra.mxu0 0
    %1777 = vmatprep.subr.bf16.mxu0 0
    %1778 = vmatpush1.bf16.msra.mxu0 0
    %1779 = vmatprep.subr.bf16.mxu0 0
    %1780 = vmatpush1.bf16.msra.mxu0 0
    %1781 = vmatprep.subr.bf16.mxu0 0
    %1782 = vmatpush1.bf16.msra.mxu0 0
    %1783 = vmatprep.subr.bf16.mxu0 0
    %1784 = vmatpush1.bf16.msra.mxu0 0
    %1785 = vmatprep.subr.bf16.mxu0 0
    %1786 = vmatpush1.bf16.msra.mxu0 0
    %1787 = vmatprep.subr.bf16.mxu0 0
    %1788 = vmatpush1.bf16.msra.mxu0 0
    %1789 = vmatprep.subr.bf16.mxu0 0
    %1790 = vmatpush1.bf16.msra.mxu0 0
    %1791 = vmatprep.subr.bf16.mxu0 0
    %1792 = vmatpush1.bf16.msra.mxu0 0
    %1793 = vmatprep.subr.bf16.mxu0 0
    %1794 = vmatpush1.bf16.msra.mxu0 0
    %1795 = vmatprep.subr.bf16.mxu0 0
    %1796 = vmatpush1.bf16.msra.mxu0 0
    %1797 = vmatprep.subr.bf16.mxu0 0
    %1798 = vmatpush1.bf16.msra.mxu0 0
    %1799 = vmatprep.subr.bf16.mxu0 0
    %1800 = vmatpush1.bf16.msra.mxu0 0
    %1801 = vmatprep.subr.bf16.mxu0 0
    %1802 = vmatpush1.bf16.msra.mxu0 0
    %1803 = vmatprep.subr.bf16.mxu0 0
    %1804 = vmatpush1.bf16.msra.mxu0 0
    %1805 = vmatprep.mubr.bf16.mxu0 0
    %1806 = vmatmul.mubr.bf16.gmra.mrb[0].mxu0 %v1768
    %v1807 = vpop.f32.mrb[0].mxu0
    %v1808 = vadd.f32 0.0, %v1807
    %v1809 = vpop.f32.mrb[0].mxu0
    %v1810 = vpop.f32.mrb[0].mxu0
    %v1811 = vpop.f32.mrb[0].mxu0
    %1812 = vdwg.mxu0
    %v1814 = vsel %vm1117, %v1579, 0
    %v1817 = vsel %vm1585, %v1114, 0
    %1819 = vmatprep.subr.bf16.mxu0 0
    %1820 = vmatpush1.bf16.msra.mxu0 %v1817
    %1821 = vmatprep.subr.bf16.mxu0 0
    %1822 = vmatpush1.bf16.msra.mxu0 0
    %1823 = vmatprep.subr.bf16.mxu0 0
    %1824 = vmatpush1.bf16.msra.mxu0 0
    %1825 = vmatprep.subr.bf16.mxu0 0
    %1826 = vmatpush1.bf16.msra.mxu0 0
    %1827 = vmatprep.subr.bf16.mxu0 0
    %1828 = vmatpush1.bf16.msra.mxu0 0
    %1829 = vmatprep.subr.bf16.mxu0 0
    %1830 = vmatpush1.bf16.msra.mxu0 0
    %1831 = vmatprep.subr.bf16.mxu0 0
    %1832 = vmatpush1.bf16.msra.mxu0 0
    %1833 = vmatprep.subr.bf16.mxu0 0
    %1834 = vmatpush1.bf16.msra.mxu0 0
    %1835 = vmatprep.subr.bf16.mxu0 0
    %1836 = vmatpush1.bf16.msra.mxu0 0
    %1837 = vmatprep.subr.bf16.mxu0 0
    %1838 = vmatpush1.bf16.msra.mxu0 0
    %1839 = vmatprep.subr.bf16.mxu0 0
    %1840 = vmatpush1.bf16.msra.mxu0 0
    %1841 = vmatprep.subr.bf16.mxu0 0
    %1842 = vmatpush1.bf16.msra.mxu0 0
    %1843 = vmatprep.subr.bf16.mxu0 0
    %1844 = vmatpush1.bf16.msra.mxu0 0
    %1845 = vmatprep.subr.bf16.mxu0 0
    %1846 = vmatpush1.bf16.msra.mxu0 0
    %1847 = vmatprep.subr.bf16.mxu0 0
    %1848 = vmatpush1.bf16.msra.mxu0 0
    %1849 = vmatprep.subr.bf16.mxu0 0
    %1850 = vmatpush1.bf16.msra.mxu0 0
    %1851 = vmatprep.mubr.bf16.mxu0 0
    %1852 = vmatmul.mubr.bf16.gmra.mrb[0].mxu0 %v1814
    %v1853 = vpop.f32.mrb[0].mxu0
    %v1854 = vadd.f32 0.0, %v1853
    %v1855 = vpop.f32.mrb[0].mxu0
    %v1856 = vpop.f32.mrb[0].mxu0
    %v1857 = vpop.f32.mrb[0].mxu0
    %1858 = vdwg.mxu0
    %v1860 = vsel %vm1117, %v1580, 0
    %v1863 = vsel %vm1585, %v1115, 0
    %1865 = vmatprep.subr.bf16.mxu0 0
    %1866 = vmatpush1.bf16.msra.mxu0 %v1863
    %1867 = vmatprep.subr.bf16.mxu0 0
    %1868 = vmatpush1.bf16.msra.mxu0 0
    %1869 = vmatprep.subr.bf16.mxu0 0
    %1870 = vmatpush1.bf16.msra.mxu0 0
    %1871 = vmatprep.subr.bf16.mxu0 0
    %1872 = vmatpush1.bf16.msra.mxu0 0
    %1873 = vmatprep.subr.bf16.mxu0 0
    %1874 = vmatpush1.bf16.msra.mxu0 0
    %1875 = vmatprep.subr.bf16.mxu0 0
    %1876 = vmatpush1.bf16.msra.mxu0 0
    %1877 = vmatprep.subr.bf16.mxu0 0
    %1878 = vmatpush1.bf16.msra.mxu0 0
    %1879 = vmatprep.subr.bf16.mxu0 0
    %1880 = vmatpush1.bf16.msra.mxu0 0
    %1881 = vmatprep.subr.bf16.mxu0 0
    %1882 = vmatpush1.bf16.msra.mxu0 0
    %1883 = vmatprep.subr.bf16.mxu0 0
    %1884 = vmatpush1.bf16.msra.mxu0 0
    %1885 = vmatprep.subr.bf16.mxu0 0
    %1886 = vmatpush1.bf16.msra.mxu0 0
    %1887 = vmatprep.subr.bf16.mxu0 0
    %1888 = vmatpush1.bf16.msra.mxu0 0
    %1889 = vmatprep.subr.bf16.mxu0 0
    %1890 = vmatpush1.bf16.msra.mxu0 0
    %1891 = vmatprep.subr.bf16.mxu0 0
    %1892 = vmatpush1.bf16.msra.mxu0 0
    %1893 = vmatprep.subr.bf16.mxu0 0
    %1894 = vmatpush1.bf16.msra.mxu0 0
    %1895 = vmatprep.subr.bf16.mxu0 0
    %1896 = vmatpush1.bf16.msra.mxu0 0
    %1897 = vmatprep.mubr.bf16.mxu0 0
    %1898 = vmatmul.mubr.bf16.gmra.mrb[0].mxu0 %v1860
    %v1899 = vpop.f32.mrb[0].mxu0
    %v1900 = vadd.f32 0.0, %v1899
    %v1901 = vpop.f32.mrb[0].mxu0
    %v1902 = vpop.f32.mrb[0].mxu0
    %v1903 = vpop.f32.mrb[0].mxu0
    %1904 = vdwg.mxu0
    %v1906 = vsel %vm1117, %v1581, 0
    %v1909 = vsel %vm1585, %v1116, 0
    %1911 = vmatprep.subr.bf16.mxu0 0
    %1912 = vmatpush1.bf16.msra.mxu0 %v1909
    %1913 = vmatprep.subr.bf16.mxu0 0
    %1914 = vmatpush1.bf16.msra.mxu0 0
    %1915 = vmatprep.subr.bf16.mxu0 0
    %1916 = vmatpush1.bf16.msra.mxu0 0
    %1917 = vmatprep.subr.bf16.mxu0 0
    %1918 = vmatpush1.bf16.msra.mxu0 0
    %1919 = vmatprep.subr.bf16.mxu0 0
    %1920 = vmatpush1.bf16.msra.mxu0 0
    %1921 = vmatprep.subr.bf16.mxu0 0
    %1922 = vmatpush1.bf16.msra.mxu0 0
    %1923 = vmatprep.subr.bf16.mxu0 0
    %1924 = vmatpush1.bf16.msra.mxu0 0
    %1925 = vmatprep.subr.bf16.mxu0 0
    %1926 = vmatpush1.bf16.msra.mxu0 0
    %1927 = vmatprep.subr.bf16.mxu0 0
    %1928 = vmatpush1.bf16.msra.mxu0 0
    %1929 = vmatprep.subr.bf16.mxu0 0
    %1930 = vmatpush1.bf16.msra.mxu0 0
    %1931 = vmatprep.subr.bf16.mxu0 0
    %1932 = vmatpush1.bf16.msra.mxu0 0
    %1933 = vmatprep.subr.bf16.mxu0 0
    %1934 = vmatpush1.bf16.msra.mxu0 0
    %1935 = vmatprep.subr.bf16.mxu0 0
    %1936 = vmatpush1.bf16.msra.mxu0 0
    %1937 = vmatprep.subr.bf16.mxu0 0
    %1938 = vmatpush1.bf16.msra.mxu0 0
    %1939 = vmatprep.subr.bf16.mxu0 0
    %1940 = vmatpush1.bf16.msra.mxu0 0
    %1941 = vmatprep.subr.bf16.mxu0 0
    %1942 = vmatpush1.bf16.msra.mxu0 0
    %1943 = vmatprep.mubr.bf16.mxu0 0
    %1944 = vmatmul.mubr.bf16.gmra.mrb[0].mxu0 %v1906
    %v1945 = vpop.f32.mrb[0].mxu0
    %v1946 = vadd.f32 0.0, %v1945
    %v1947 = vpop.f32.mrb[0].mxu0
    %v1948 = vpop.f32.mrb[0].mxu0
    %v1949 = vpop.f32.mrb[0].mxu0
    %1950 = vdwg.mxu0
    %v1951 = vcombine.low %v1624, %v1716
    %v1952 = vcombine.high %v1624, %v1716
    %v1954 = vunpack.c.l.s4 1983009808
    %v1955 = vunpack.c.0.s8 %v1954
    %v1956 = vlaneseq
    %v1957 = vshrl.u32 %v1956, 7
    %v1958 = vsub.s32 %v1955, %v1957
    %v1959 = vrot.slane %v1951, %v1958
    %v1961 = vunpack.c.l.s4 1983009808
    %v1962 = vunpack.c.0.s8 %v1961
    %v1963 = vlaneseq
    %v1964 = vshrl.u32 %v1963, 7
    %v1965 = vsub.s32 %v1962, %v1964
    %v1966 = vrot.slane %v1952, %v1965
    %v1967 = vcombine.low %v1670, %v1762
    %v1968 = vcombine.high %v1670, %v1762
    %v1970 = vunpack.c.l.s4 1983009808
    %v1971 = vunpack.c.0.s8 %v1970
    %v1972 = vlaneseq
    %v1973 = vshrl.u32 %v1972, 7
    %v1974 = vsub.s32 %v1971, %v1973
    %v1975 = vrot.slane %v1967, %v1974
    %v1977 = vunpack.c.l.s4 1983009808
    %v1978 = vunpack.c.0.s8 %v1977
    %v1979 = vlaneseq
    %v1980 = vshrl.u32 %v1979, 7
    %v1981 = vsub.s32 %v1978, %v1980
    %v1982 = vrot.slane %v1968, %v1981
    %v1983 = vcombine.low %v1959, %v1975
    %v1984 = vcombine.high %v1959, %v1975
    %v1986 = vunpack.c.l.s4 1934713408
    %v1987 = vunpack.c.0.s8 %v1986
    %v1988 = vlaneseq
    %v1989 = vshrl.u32 %v1988, 7
    %v1990 = vsub.s32 %v1987, %v1989
    %v1991 = vrot.slane %v1983, %v1990
    %v1993 = vunpack.c.l.s4 1934713408
    %v1994 = vunpack.c.0.s8 %v1993
    %v1995 = vlaneseq
    %v1996 = vshrl.u32 %v1995, 7
    %v1997 = vsub.s32 %v1994, %v1996
    %v1998 = vrot.slane %v1984, %v1997
    %v1999 = vcombine.low %v1966, %v1982
    %v2000 = vcombine.high %v1966, %v1982
    %v2002 = vunpack.c.l.s4 1934713408
    %v2003 = vunpack.c.0.s8 %v2002
    %v2004 = vlaneseq
    %v2005 = vshrl.u32 %v2004, 7
    %v2006 = vsub.s32 %v2003, %v2005
    %v2007 = vrot.slane %v1999, %v2006
    %v2009 = vunpack.c.l.s4 1934713408
    %v2010 = vunpack.c.0.s8 %v2009
    %v2011 = vlaneseq
    %v2012 = vshrl.u32 %v2011, 7
    %v2013 = vsub.s32 %v2010, %v2012
    %v2014 = vrot.slane %v2000, %v2013
    %v2015 = vcombine.high %v1991, 0.0
    %v2016 = vcombine.high %v1998, 0.0
    %v2017 = vcombine.high %v2007, 0.0
    %v2018 = vcombine.high %v2014, 0.0
    %v2019 = vcombine.low %v1808, %v1900
    %v2020 = vcombine.high %v1808, %v1900
    %v2022 = vunpack.c.l.s4 1983009808
    %v2023 = vunpack.c.0.s8 %v2022
    %v2024 = vlaneseq
    %v2025 = vshrl.u32 %v2024, 7
    %v2026 = vsub.s32 %v2023, %v2025
    %v2027 = vrot.slane %v2019, %v2026
    %v2029 = vunpack.c.l.s4 1983009808
    %v2030 = vunpack.c.0.s8 %v2029
    %v2031 = vlaneseq
    %v2032 = vshrl.u32 %v2031, 7
    %v2033 = vsub.s32 %v2030, %v2032
    %v2034 = vrot.slane %v2020, %v2033
    %v2035 = vcombine.low %v1854, %v1946
    %v2036 = vcombine.high %v1854, %v1946
    %v2038 = vunpack.c.l.s4 1983009808
    %v2039 = vunpack.c.0.s8 %v2038
    %v2040 = vlaneseq
    %v2041 = vshrl.u32 %v2040, 7
    %v2042 = vsub.s32 %v2039, %v2041
    %v2043 = vrot.slane %v2035, %v2042
    %v2045 = vunpack.c.l.s4 1983009808
    %v2046 = vunpack.c.0.s8 %v2045
    %v2047 = vlaneseq
    %v2048 = vshrl.u32 %v2047, 7
    %v2049 = vsub.s32 %v2046, %v2048
    %v2050 = vrot.slane %v2036, %v2049
    %v2051 = vcombine.low %v2027, %v2043
    %v2052 = vcombine.high %v2027, %v2043
    %v2054 = vunpack.c.l.s4 1934713408
    %v2055 = vunpack.c.0.s8 %v2054
    %v2056 = vlaneseq
    %v2057 = vshrl.u32 %v2056, 7
    %v2058 = vsub.s32 %v2055, %v2057
    %v2059 = vrot.slane %v2051, %v2058
    %v2061 = vunpack.c.l.s4 1934713408
    %v2062 = vunpack.c.0.s8 %v2061
    %v2063 = vlaneseq
    %v2064 = vshrl.u32 %v2063, 7
    %v2065 = vsub.s32 %v2062, %v2064
    %v2066 = vrot.slane %v2052, %v2065
    %v2067 = vcombine.low %v2034, %v2050
    %v2068 = vcombine.high %v2034, %v2050
    %v2070 = vunpack.c.l.s4 1934713408
    %v2071 = vunpack.c.0.s8 %v2070
    %v2072 = vlaneseq
    %v2073 = vshrl.u32 %v2072, 7
    %v2074 = vsub.s32 %v2071, %v2073
    %v2075 = vrot.slane %v2067, %v2074
    %v2077 = vunpack.c.l.s4 1934713408
    %v2078 = vunpack.c.0.s8 %v2077
    %v2079 = vlaneseq
    %v2080 = vshrl.u32 %v2079, 7
    %v2081 = vsub.s32 %v2078, %v2080
    %v2082 = vrot.slane %v2068, %v2081
    %v2083 = vcombine.high %v2059, 0.0
    %v2084 = vcombine.high %v2066, 0.0
    %v2085 = vcombine.high %v2075, 0.0
    %v2086 = vcombine.high %v2082, 0.0
    %v2087 = vcombine.low %v1991, %v1998
    %v2089 = vunpack.c.l.s4 1983009808
    %v2090 = vunpack.c.0.s8 %v2089
    %v2091 = vlaneseq
    %v2092 = vshrl.u32 %v2091, 7
    %v2093 = vsub.s32 %v2090, %v2092
    %v2094 = vrot.slane %v2087, %v2093
    %v2095 = vcombine.low %v2015, %v2016
    %v2097 = vunpack.c.l.s4 1983009808
    %v2098 = vunpack.c.0.s8 %v2097
    %v2099 = vlaneseq
    %v2100 = vshrl.u32 %v2099, 7
    %v2101 = vsub.s32 %v2098, %v2100
    %v2102 = vrot.slane %v2095, %v2101
    %v2103 = vcombine.low %v2007, %v2014
    %v2105 = vunpack.c.l.s4 1983009808
    %v2106 = vunpack.c.0.s8 %v2105
    %v2107 = vlaneseq
    %v2108 = vshrl.u32 %v2107, 7
    %v2109 = vsub.s32 %v2106, %v2108
    %v2110 = vrot.slane %v2103, %v2109
    %v2111 = vcombine.low %v2017, %v2018
    %v2113 = vunpack.c.l.s4 1983009808
    %v2114 = vunpack.c.0.s8 %v2113
    %v2115 = vlaneseq
    %v2116 = vshrl.u32 %v2115, 7
    %v2117 = vsub.s32 %v2114, %v2116
    %v2118 = vrot.slane %v2111, %v2117
    %v2119 = vcombine.low %v2094, %v2102
    %v2120 = vcombine.high %v2094, %v2102
    %v2122 = vunpack.c.l.s4 1934713408
    %v2123 = vunpack.c.0.s8 %v2122
    %v2124 = vlaneseq
    %v2125 = vshrl.u32 %v2124, 7
    %v2126 = vsub.s32 %v2123, %v2125
    %v2127 = vrot.slane %v2119, %v2126
    %v2129 = vunpack.c.l.s4 1934713408
    %v2130 = vunpack.c.0.s8 %v2129
    %v2131 = vlaneseq
    %v2132 = vshrl.u32 %v2131, 7
    %v2133 = vsub.s32 %v2130, %v2132
    %v2134 = vrot.slane %v2120, %v2133
    %v2135 = vcombine.low %v2110, %v2118
    %v2136 = vcombine.high %v2110, %v2118
    %v2138 = vunpack.c.l.s4 1934713408
    %v2139 = vunpack.c.0.s8 %v2138
    %v2140 = vlaneseq
    %v2141 = vshrl.u32 %v2140, 7
    %v2142 = vsub.s32 %v2139, %v2141
    %v2143 = vrot.slane %v2135, %v2142
    %v2145 = vunpack.c.l.s4 1934713408
    %v2146 = vunpack.c.0.s8 %v2145
    %v2147 = vlaneseq
    %v2148 = vshrl.u32 %v2147, 7
    %v2149 = vsub.s32 %v2146, %v2148
    %v2150 = vrot.slane %v2136, %v2149
    %v2151 = vcombine.low %v2127, %v2143
    %v2152 = vcombine.high %v2127, %v2143
    %v2153 = vcombine.low %v2134, %v2150
    %v2154 = vcombine.high %v2134, %v2150
    %v2155 = vcombine.low %v2059, %v2066
    %v2157 = vunpack.c.l.s4 1983009808
    %v2158 = vunpack.c.0.s8 %v2157
    %v2159 = vlaneseq
    %v2160 = vshrl.u32 %v2159, 7
    %v2161 = vsub.s32 %v2158, %v2160
    %v2162 = vrot.slane %v2155, %v2161
    %v2163 = vcombine.low %v2083, %v2084
    %v2165 = vunpack.c.l.s4 1983009808
    %v2166 = vunpack.c.0.s8 %v2165
    %v2167 = vlaneseq
    %v2168 = vshrl.u32 %v2167, 7
    %v2169 = vsub.s32 %v2166, %v2168
    %v2170 = vrot.slane %v2163, %v2169
    %v2171 = vcombine.low %v2075, %v2082
    %v2173 = vunpack.c.l.s4 1983009808
    %v2174 = vunpack.c.0.s8 %v2173
    %v2175 = vlaneseq
    %v2176 = vshrl.u32 %v2175, 7
    %v2177 = vsub.s32 %v2174, %v2176
    %v2178 = vrot.slane %v2171, %v2177
    %v2179 = vcombine.low %v2085, %v2086
    %v2181 = vunpack.c.l.s4 1983009808
    %v2182 = vunpack.c.0.s8 %v2181
    %v2183 = vlaneseq
    %v2184 = vshrl.u32 %v2183, 7
    %v2185 = vsub.s32 %v2182, %v2184
    %v2186 = vrot.slane %v2179, %v2185
    %v2187 = vcombine.low %v2162, %v2170
    %v2188 = vcombine.high %v2162, %v2170
    %v2190 = vunpack.c.l.s4 1934713408
    %v2191 = vunpack.c.0.s8 %v2190
    %v2192 = vlaneseq
    %v2193 = vshrl.u32 %v2192, 7
    %v2194 = vsub.s32 %v2191, %v2193
    %v2195 = vrot.slane %v2187, %v2194
    %v2197 = vunpack.c.l.s4 1934713408
    %v2198 = vunpack.c.0.s8 %v2197
    %v2199 = vlaneseq
    %v2200 = vshrl.u32 %v2199, 7
    %v2201 = vsub.s32 %v2198, %v2200
    %v2202 = vrot.slane %v2188, %v2201
    %v2203 = vcombine.low %v2178, %v2186
    %v2204 = vcombine.high %v2178, %v2186
    %v2206 = vunpack.c.l.s4 1934713408
    %v2207 = vunpack.c.0.s8 %v2206
    %v2208 = vlaneseq
    %v2209 = vshrl.u32 %v2208, 7
    %v2210 = vsub.s32 %v2207, %v2209
    %v2211 = vrot.slane %v2203, %v2210
    %v2213 = vunpack.c.l.s4 1934713408
    %v2214 = vunpack.c.0.s8 %v2213
    %v2215 = vlaneseq
    %v2216 = vshrl.u32 %v2215, 7
    %v2217 = vsub.s32 %v2214, %v2216
    %v2218 = vrot.slane %v2204, %v2217
    %v2219 = vcombine.low %v2195, %v2211
    %v2220 = vcombine.high %v2195, %v2211
    %v2221 = vcombine.low %v2202, %v2218
    %v2222 = vcombine.high %v2202, %v2218
    %2225 = vrot.lane.b32.xlu0 %v2152, 8
    %v2226 = vpop.permute.xlu0 %2225
    %2227 = vrot.lane.b32.xlu0 %v2220, 8
    %v2228 = vpop.permute.xlu0 %2227
    %2233 = vrot.lane.b32.xlu0 %v2153, 16
    %v2234 = vpop.permute.xlu0 %2233
    %2235 = vrot.lane.b32.xlu0 %v2221, 16
    %v2236 = vpop.permute.xlu0 %2235
    %2241 = vrot.lane.b32.xlu0 %v2154, 24
    %v2242 = vpop.permute.xlu0 %2241
    %2243 = vrot.lane.b32.xlu0 %v2222, 24
    %v2244 = vpop.permute.xlu0 %2243
    %v2247 = vsel %vm1117, %v2151, %v2226
    %v2248 = vsel %vm1117, %v2219, %v2228
    %vm2249 = vcmask 130048
    %v2250 = vsel %vm2249, %v2247, %v2234
    %v2251 = vsel %vm2249, %v2248, %v2236
    %vm2252 = vcmask 195584
    %v2253 = vsel %vm2252, %v2250, %v2242
    %v2254 = vsel %vm2252, %v2251, %v2244
    %v2255 = vpack.c.bf16 %v2254, %v2253
    %v2256 = vld [vmem:[%s5] sm:$0xf]
    %v2257 = vld [vmem:[%s5 + $0x4] sm:$0xf]
    %v2258 = vld [vmem:[%s5 + $0x8] sm:$0xf]
    %v2259 = vld [vmem:[%s5 + $0xc] sm:$0xf]
    %v2260 = vld [vmem:[#allocation5] sm:$0x1]
    %v2262 = vlaneseq
    %v2263 = vshrl.u32 %v2262, 7
    %v2264 = vsub.s32 0, %v2263
    %v2265 = vrot.slane %v2260, %v2264
    %v2271 = vunpack.c.l.b16 %v2256
    %v2272 = vunpack.c.l.b16 %v2257
    %v2273 = vunpack.c.l.b16 %v2258
    %v2274 = vunpack.c.l.b16 %v2259
    %v2275 = vpack.c.b16 %v2272, %v2271
    %v2276 = vpack.c.b16 %v2274, %v2273
    %v2280 = vsel %vm97, %v2255, 0
    %2282 = vmatprep.subr.bf16.mxu0 0
    %2283 = vmatpush1.bf16.msra.mxu0 %v2275
    %2284 = vmatprep.subr.bf16.mxu0 0
    %2285 = vmatpush1.bf16.msra.mxu0 %v2276
    %2286 = vmatprep.subr.bf16.mxu0 0
    %2287 = vmatpush1.bf16.msra.mxu0 0
    %2288 = vmatprep.subr.bf16.mxu0 0
    %2289 = vmatpush1.bf16.msra.mxu0 0
    %2290 = vmatprep.subr.bf16.mxu0 0
    %2291 = vmatpush1.bf16.msra.mxu0 0
    %2292 = vmatprep.subr.bf16.mxu0 0
    %2293 = vmatpush1.bf16.msra.mxu0 0
    %2294 = vmatprep.subr.bf16.mxu0 0
    %2295 = vmatpush1.bf16.msra.mxu0 0
    %2296 = vmatprep.subr.bf16.mxu0 0
    %2297 = vmatpush1.bf16.msra.mxu0 0
    %2298 = vmatprep.subr.bf16.mxu0 0
    %2299 = vmatpush1.bf16.msra.mxu0 0
    %2300 = vmatprep.subr.bf16.mxu0 0
    %2301 = vmatpush1.bf16.msra.mxu0 0
    %2302 = vmatprep.subr.bf16.mxu0 0
    %2303 = vmatpush1.bf16.msra.mxu0 0
    %2304 = vmatprep.subr.bf16.mxu0 0
    %2305 = vmatpush1.bf16.msra.mxu0 0
    %2306 = vmatprep.subr.bf16.mxu0 0
    %2307 = vmatpush1.bf16.msra.mxu0 0
    %2308 = vmatprep.subr.bf16.mxu0 0
    %2309 = vmatpush1.bf16.msra.mxu0 0
    %2310 = vmatprep.subr.bf16.mxu0 0
    %2311 = vmatpush1.bf16.msra.mxu0 0
    %2312 = vmatprep.subr.bf16.mxu0 0
    %2313 = vmatpush1.bf16.msra.mxu0 0
    %2314 = vmatprep.mubr.bf16.mxu0 0
    %2315 = vmatmul.mubr.bf16.gmra.mrb[0].mxu0 %v2280
    %v2316 = vpop.f32.mrb[0].mxu0
    %v2317 = vadd.f32 %v2265, %v2316
    %v2318 = vpop.f32.mrb[0].mxu0
    %v2319 = vpop.f32.mrb[0].mxu0
    %v2320 = vadd.f32 %v2265, %v2319
    %v2321 = vpop.f32.mrb[0].mxu0
    %2322 = vdwg.mxu0
    %v2323 = vadd.f32 %v2317, %v93
    %v2324 = vadd.f32 %v2320, %v94
    %v2325 = vld [vmem:[#allocation7] sm:$0x1]
    %v2326 = vld [vmem:[#allocation8] sm:$0x1]
    %v2327 = vsel %vm97, %v2323, 0.0
    %2328 = vadd.xlane.f32.xlu0 %v2327
    %v2329 = vpop.xlane.xlu0 %2328
    %v2330 = vsel %vm97, %v2324, 0.0
    %2331 = vadd.xlane.f32.xlu0 %v2330
    %v2332 = vpop.xlane.xlu0 %2331
    %v2333 = vmul.f32 %v2329, %v104
    %v2334 = vmul.f32 %v2332, %v104
    %v2335 = vsub.f32 %v2323, %v2333
    %v2336 = vsub.f32 %v2324, %v2334
    %v2337 = vmul.f32 %v2335, %v2335
    %v2338 = vmul.f32 %v2336, %v2336
    %v2339 = vsel %vm97, %v2337, 0.0
    %2340 = vadd.xlane.f32.xlu0 %v2339
    %v2341 = vpop.xlane.xlu0 %2340
    %v2342 = vsel %vm97, %v2338, 0.0
    %2343 = vadd.xlane.f32.xlu0 %v2342
    %v2344 = vpop.xlane.xlu0 %2343
    %v2345 = vmul.f32 %v2341, %v104
    %v2346 = vmul.f32 %v2344, %v104
    %v2347 = vadd.f32 %v2345, 1e-05
    %v2348 = vadd.f32 %v2346, 1e-05
    %v2349 = vrsqrt.pop %v2347
    %v2350 = vrsqrt.pop %v2348
    %v2351 = vmul.f32 %v2335, %v2349
    %v2352 = vmul.f32 %v2336, %v2350
    %v2354 = vlaneseq
    %v2355 = vshrl.u32 %v2354, 7
    %v2356 = vsub.s32 0, %v2355
    %v2357 = vrot.slane %v2325, %v2356
    %v2359 = vmul.f32 %v2351, %v2357
    %v2360 = vmul.f32 %v2352, %v2357
    %v2362 = vlaneseq
    %v2363 = vshrl.u32 %v2362, 7
    %v2364 = vsub.s32 0, %v2363
    %v2365 = vrot.slane %v2326, %v2364
    %v2367 = vadd.f32 %v2359, %v2365
    %v2368 = vadd.f32 %v2360, %v2365
    %v2369 = vpack.c.bf16 %v2368, %v2367
    %v2370 = vld [vmem:[%s9] sm:$0xf]
    %v2371 = vld [vmem:[%s9 + $0x4] sm:$0xf]
    %v2372 = vld [vmem:[%s9 + $0x8] sm:$0xf]
    %v2373 = vld [vmem:[%s9 + $0xc] sm:$0xf]
    %v2374 = vld [vmem:[%s10] sm:$0x1]
    %v2376 = vlaneseq
    %v2377 = vshrl.u32 %v2376, 7
    %v2378 = vsub.s32 0, %v2377
    %v2379 = vrot.slane %v2374, %v2378
    %v2385 = vunpack.c.l.b16 %v2370
    %v2386 = vunpack.c.l.b16 %v2371
    %v2387 = vunpack.c.l.b16 %v2372
    %v2388 = vunpack.c.l.b16 %v2373
    %v2389 = vpack.c.b16 %v2386, %v2385
    %v2390 = vpack.c.b16 %v2388, %v2387
    %v2394 = vsel %vm97, %v2369, 0
    %2396 = vmatprep.subr.bf16.mxu0 0
    %2397 = vmatpush1.bf16.msra.mxu0 %v2389
    %2398 = vmatprep.subr.bf16.mxu0 0
    %2399 = vmatpush1.bf16.msra.mxu0 %v2390
    %2400 = vmatprep.subr.bf16.mxu0 0
    %2401 = vmatpush1.bf16.msra.mxu0 0
    %2402 = vmatprep.subr.bf16.mxu0 0
    %2403 = vmatpush1.bf16.msra.mxu0 0
    %2404 = vmatprep.subr.bf16.mxu0 0
    %2405 = vmatpush1.bf16.msra.mxu0 0
    %2406 = vmatprep.subr.bf16.mxu0 0
    %2407 = vmatpush1.bf16.msra.mxu0 0
    %2408 = vmatprep.subr.bf16.mxu0 0
    %2409 = vmatpush1.bf16.msra.mxu0 0
    %2410 = vmatprep.subr.bf16.mxu0 0
    %2411 = vmatpush1.bf16.msra.mxu0 0
    %2412 = vmatprep.subr.bf16.mxu0 0
    %2413 = vmatpush1.bf16.msra.mxu0 0
    %2414 = vmatprep.subr.bf16.mxu0 0
    %2415 = vmatpush1.bf16.msra.mxu0 0
    %2416 = vmatprep.subr.bf16.mxu0 0
    %2417 = vmatpush1.bf16.msra.mxu0 0
    %2418 = vmatprep.subr.bf16.mxu0 0
    %2419 = vmatpush1.bf16.msra.mxu0 0
    %2420 = vmatprep.subr.bf16.mxu0 0
    %2421 = vmatpush1.bf16.msra.mxu0 0
    %2422 = vmatprep.subr.bf16.mxu0 0
    %2423 = vmatpush1.bf16.msra.mxu0 0
    %2424 = vmatprep.subr.bf16.mxu0 0
    %2425 = vmatpush1.bf16.msra.mxu0 0
    %2426 = vmatprep.subr.bf16.mxu0 0
    %2427 = vmatpush1.bf16.msra.mxu0 0
    %2428 = vmatprep.mubr.bf16.mxu0 0
    %2429 = vmatmul.mubr.bf16.gmra.mrb[0].mxu0 %v2394
    %v2430 = vpop.f32.mrb[0].mxu0
    %v2431 = vadd.f32 %v2379, %v2430
    %v2432 = vpop.f32.mrb[0].mxu0
    %v2433 = vpop.f32.mrb[0].mxu0
    %v2434 = vadd.f32 %v2379, %v2433
    %v2435 = vpop.f32.mrb[0].mxu0
    %2436 = vdwg.mxu0
    %v2437 = vmul.f32 %v2431, 0.5
    %v2438 = vmul.f32 %v2434, 0.5
    %v2439 = vmul.f32 %v2431, 0.044715
    %v2440 = vmul.f32 %v2434, 0.044715
    %v2441 = vmul.f32 %v2439, %v2431
    %v2442 = vmul.f32 %v2440, %v2434
    %v2443 = vmul.f32 %v2441, %v2431
    %v2444 = vmul.f32 %v2442, %v2434
    %v2445 = vadd.f32 %v2431, %v2443
    %v2446 = vadd.f32 %v2434, %v2444
    %v2447 = vmul.f32 %v2445, 0.7978846
    %v2448 = vmul.f32 %v2446, 0.7978846
    %v2449 = vtanh.pop %v2447
    %v2450 = vtanh.pop %v2448
    %v2451 = vadd.f32 %v2449, 1.0
    %v2452 = vadd.f32 %v2450, 1.0
    %v2453 = vmul.f32 %v2437, %v2451
    %v2454 = vmul.f32 %v2438, %v2452
    %v2455 = vpack.c.bf16 %v2454, %v2453
    %v2456 = vld [vmem:[%s11] sm:$0xf]
    %v2457 = vld [vmem:[%s11 + $0x4] sm:$0xf]
    %v2458 = vld [vmem:[%s11 + $0x8] sm:$0xf]
    %v2459 = vld [vmem:[%s11 + $0xc] sm:$0xf]
    %v2460 = vld [vmem:[%s11 + $0x10] sm:$0xf]
    %v2461 = vld [vmem:[%s11 + $0x14] sm:$0xf]
    %v2462 = vld [vmem:[%s11 + $0x18] sm:$0xf]
    %v2463 = vld [vmem:[%s11 + $0x1c] sm:$0xf]
    %v2464 = vld [vmem:[%s12] sm:$0x1]
    %v2466 = vlaneseq
    %v2467 = vshrl.u32 %v2466, 7
    %v2468 = vsub.s32 0, %v2467
    %v2469 = vrot.slane %v2464, %v2468
    %v2479 = vunpack.c.l.b16 %v2456
    %v2480 = vunpack.c.l.b16 %v2457
    %v2481 = vunpack.c.l.b16 %v2458
    %v2482 = vunpack.c.l.b16 %v2459
    %v2483 = vunpack.c.l.b16 %v2460
    %v2484 = vunpack.c.l.b16 %v2461
    %v2485 = vunpack.c.l.b16 %v2462
    %v2486 = vunpack.c.l.b16 %v2463
    %v2487 = vpack.c.b16 %v2480, %v2479
    %v2488 = vpack.c.b16 %v2482, %v2481
    %v2489 = vpack.c.b16 %v2484, %v2483
    %v2490 = vpack.c.b16 %v2486, %v2485
    %vm2495 = vcmask 523264
    %v2497 = vsel %vm2495, %v2455, 0
    %2499 = vmatprep.subr.bf16.mxu0 0
    %2500 = vmatpush1.bf16.msra.mxu0 %v2487
    %2501 = vmatprep.subr.bf16.mxu0 0
    %2502 = vmatpush1.bf16.msra.mxu0 %v2488
    %2503 = vmatprep.subr.bf16.mxu0 0
    %2504 = vmatpush1.bf16.msra.mxu0 %v2489
    %2505 = vmatprep.subr.bf16.mxu0 0
    %2506 = vmatpush1.bf16.msra.mxu0 %v2490
    %2507 = vmatprep.subr.bf16.mxu0 0
    %2508 = vmatpush1.bf16.msra.mxu0 0
    %2509 = vmatprep.subr.bf16.mxu0 0
    %2510 = vmatpush1.bf16.msra.mxu0 0
    %2511 = vmatprep.subr.bf16.mxu0 0
    %2512 = vmatpush1.bf16.msra.mxu0 0
    %2513 = vmatprep.subr.bf16.mxu0 0
    %2514 = vmatpush1.bf16.msra.mxu0 0
    %2515 = vmatprep.subr.bf16.mxu0 0
    %2516 = vmatpush1.bf16.msra.mxu0 0
    %2517 = vmatprep.subr.bf16.mxu0 0
    %2518 = vmatpush1.bf16.msra.mxu0 0
    %2519 = vmatprep.subr.bf16.mxu0 0
    %2520 = vmatpush1.bf16.msra.mxu0 0
    %2521 = vmatprep.subr.bf16.mxu0 0
    %2522 = vmatpush1.bf16.msra.mxu0 0
    %2523 = vmatprep.subr.bf16.mxu0 0
    %2524 = vmatpush1.bf16.msra.mxu0 0
    %2525 = vmatprep.subr.bf16.mxu0 0
    %2526 = vmatpush1.bf16.msra.mxu0 0
    %2527 = vmatprep.subr.bf16.mxu0 0
    %2528 = vmatpush1.bf16.msra.mxu0 0
    %2529 = vmatprep.subr.bf16.mxu0 0
    %2530 = vmatpush1.bf16.msra.mxu0 0
    %2531 = vmatprep.mubr.bf16.mxu0 0
    %2532 = vmatmul.mubr.bf16.gmra.mrb[0].mxu0 %v2497
    %v2533 = vpop.f32.mrb[0].mxu0
    %v2534 = vadd.f32 %v2469, %v2533
    %v2535 = vpop.f32.mrb[0].mxu0
    %v2536 = vpop.f32.mrb[0].mxu0
    %v2537 = vadd.f32 %v2469, %v2536
    %v2538 = vpop.f32.mrb[0].mxu0
    %2539 = vdwg.mxu0
    %v2540 = vadd.f32 %v2534, %v2323
    %v2541 = vadd.f32 %v2537, %v2324
    %2542 = vst.msk [vmem:[#allocation10] sm:$0xff] %vm97, %v2540
    %2543 = vst.msk [vmem:[#allocation10 + $0x8] sm:$0xff] %vm97, %v2541
    // Predicated region
    $region70: #{tpu_custom_call.1} parent=1 // pred_check
      _
    $region71: #{tpu_custom_call.1} parent=1 // pred_check_branch
      %2545 = sbr.rel (0) target = $region73
    $region72: #{tpu_custom_call.1} parent=1 // pred_region
      %s2547 = ssub.s32 256, 256
      %2548 = vsyncadd [#allocation4], %s2547
      %s2549 = sshll.u32 [#allocation10], 4
      %s2550 = int_to_ptr.vmem [resolvable:$true] %s2549
      %2555 = dma.vmem_to_hbm [thread:$0]  %s2550, 256, %s13, [#allocation4], 128, 128, 8
    $region73: #{tpu_custom_call.1} parent=1 // pred_fallthru
      _
    // Predicated region
    $region74: #{tpu_custom_call.1} parent=1 // pred_check
      _
    $region75: #{tpu_custom_call.1} parent=1 // pred_check_branch
      %2557 = sbr.rel (0) target = $region77
    $region76: #{tpu_custom_call.1} parent=1 // pred_region
      %2558 = dma.done [#allocation4], 256
    $region77: #{tpu_custom_call.1} parent=1 // pred_fallthru
      _
    %2559 = vsyncpa [#allocation3], 1
    %2560 = vsyncpa [#allocation6], 1
    %2561 = vsyncpa [#allocation9], 1
    %2562 = vsyncpa [#allocation4], 1

</llo_original>
